<compile_context>
chip_gen: v7x
topology: tpu7x:2x2x1
jax: 0.10.0
libtpu: 0.0.40
codegen_flags: <defaults>
</compile_context>

<pallas_src>
import jax
import jax.numpy as jnp
from jax.experimental import pallas as pl
from jax.experimental.pallas import tpu as pltpu

F_PAD = 128          # padded feature width (sublane axis)
CARRY = F_PAD - 1    # constant-1 carry sublane used to fold biases
TB = 512             # batch tile (lane axis); multiple of 128; >=2 tiles => megacore
NEG_SLOPE = 0.01     # F.leaky_relu default

LAYER_DIMS = [(1, 80), (80, 60), (60, 40), (40, 20), (20, 1)]  # (in, out)


def _mlp_kernel(x_ref, w1_ref, b1_ref, w2_ref, w3_ref, w4_ref, w5_ref, o_ref):
    def lrelu(v):
        return jnp.where(v > 0, v, NEG_SLOPE * v)

    z = x_ref[...]                                        # (1, TB), batch on lanes

    # Layer 1: in_features == 1 -> VPU broadcast instead of a wasted MXU matmul.
    # b1_ref carries the bias AND a 1.0 at sublane CARRY that feeds the folded
    # biases of the deeper layers (lrelu(1) == 1 keeps it alive).
    h = lrelu(w1_ref[...] * z + b1_ref[...])              # (128, TB)

    # Layers 2-4: (128,128) @ (128,TB) MXU matmuls; biases folded via carry row.
    h = lrelu(jnp.dot(w2_ref[...], h, preferred_element_type=jnp.float32))
    h = lrelu(jnp.dot(w3_ref[...], h, preferred_element_type=jnp.float32))
    h = lrelu(jnp.dot(w4_ref[...], h, preferred_element_type=jnp.float32))

    # Layer 5: out_features == 1 -> multiply + sublane reduce (b5 folded into
    # w5_ref[CARRY]); keeps the (1, TB) output lane-dense.
    o_ref[...] = jnp.sum(w5_ref[...] * h, axis=0, keepdims=True)   # (1, TB)


def prepare_params(params):
    """Pad / transpose / bias-fold the torch-layout params once, outside the hot path.

    params: list of (W (out,in), b (out,)) per layer, torch nn.Linear layout.
    """
    (W1, b1), (W2, b2), (W3, b3), (W4, b4), (W5, b5) = params

    w1c = jnp.zeros((F_PAD, 1), jnp.float32).at[: W1.shape[0], 0].set(W1[:, 0])
    b1c = jnp.zeros((F_PAD, 1), jnp.float32).at[: b1.shape[0], 0].set(b1)
    b1c = b1c.at[CARRY, 0].set(1.0)           # establish the carry sublane

    def fold(W, b):
        out_f, in_f = W.shape
        wp = jnp.zeros((F_PAD, F_PAD), jnp.float32)
        wp = wp.at[:out_f, :in_f].set(W)      # y = W @ h (features on sublanes)
        wp = wp.at[:out_f, CARRY].set(b)      # + b * carry
        wp = wp.at[CARRY, CARRY].set(1.0)     # propagate the carry
        return wp

    w5c = jnp.zeros((F_PAD, 1), jnp.float32).at[: W5.shape[1], 0].set(W5[0, :])
    w5c = w5c.at[CARRY, 0].set(b5[0])         # + b5 * carry

    return (w1c, b1c, fold(W2, b2), fold(W3, b3), fold(W4, b4), w5c)


@jax.jit
def fit_forward(z, kparams):
    """z: (N, 1) float32. kparams: output of prepare_params (already padded)."""
    w1c, b1c, w2p, w3p, w4p, w5c = kparams
    n = z.shape[0]
    z2d = z.reshape(n, -1).astype(jnp.float32)            # z.view(z.size(0), -1)
    n_pad = pl.cdiv(n, TB) * TB

    # batch-in-lanes: (1, n_pad) with batch along lanes (4 B/sample of HBM I/O)
    x_t = jnp.zeros((1, n_pad), jnp.float32).at[0, :n].set(z2d[:, 0])

    grid = (n_pad // TB,)
    col_spec = pl.BlockSpec((F_PAD, 1), lambda i: (0, 0))
    mat_spec = pl.BlockSpec((F_PAD, F_PAD), lambda i: (0, 0))

    out_t = pl.pallas_call(
        _mlp_kernel,
        out_shape=jax.ShapeDtypeStruct((1, n_pad), jnp.float32),
        grid_spec=pltpu.PrefetchScalarGridSpec(
            num_scalar_prefetch=0,
            grid=grid,
            in_specs=[
                pl.BlockSpec((1, TB), lambda i: (0, i)),   # x (batch tile on lanes)
                col_spec, col_spec,                        # w1, b1 (+carry)
                mat_spec, mat_spec, mat_spec,              # w2..w4 (bias folded)
                col_spec,                                  # w5 (+b5)
            ],
            out_specs=pl.BlockSpec((1, TB), lambda i: (0, i)),
        ),
        compiler_params=pltpu.CompilerParams(
            dimension_semantics=("parallel",)),
    )(x_t, w1c, b1c, w2p, w3p, w4p, w5c)

    # Padded batch lanes carry bias-propagated garbage -> slice them off.
    return out_t[0, :n].reshape(n, 1)


def init_params(key):
    """PyTorch nn.Linear default init: U(-1/sqrt(fan_in), 1/sqrt(fan_in)), torch layout."""
    params = []
    for (fan_in, fan_out) in LAYER_DIMS:
        key, kw, kb = jax.random.split(key, 3)
        bound = 1.0 / jnp.sqrt(jnp.float32(fan_in))
        w = jax.random.uniform(kw, (fan_out, fan_in), jnp.float32, -bound, bound)
        b = jax.random.uniform(kb, (fan_out,), jnp.float32, -bound, bound)
        params.append((w, b))
    return params


def _reference(z, params):
    x = z.reshape(z.shape[0], -1).astype(jnp.float32)
    for i, (w, b) in enumerate(params):
        x = x @ w.T + b
        if i < len(params) - 1:
            x = jnp.where(x > 0, x, NEG_SLOPE * x)
    return x


if __name__ == "__main__":
    key = jax.random.PRNGKey(0)
    kz, kp = jax.random.split(key)
    params = init_params(kp)
    kparams = prepare_params(params)       # one-time padding/bias-folding

    # Curve-fitting batch of 1024 scalar samples -> 2 parallel grid steps at TB=512
    # (lets v7x's two TensorCores each take one tile).
    z = jax.random.uniform(kz, (1024, 1), jnp.float32, -1.0, 1.0)

    out = jax.block_until_ready(fit_forward(z, kparams))
    ref = _reference(z, params)

    assert out.shape == (1024, 1), out.shape
    assert jnp.allclose(out, ref, atol=1e-4, rtol=1e-4), \
        float(jnp.max(jnp.abs(out - ref)))
    print("KERNEL_OK")
</pallas_src>

<mosaic_0001>
module attributes {stable_mosaic.version = 11 : i64} {
  func.func @_mlp_kernel(%arg0: i32, %arg1: memref<1x512xf32, #tpu.memory_space<vmem>>, %arg2: memref<128x1xf32, #tpu.memory_space<vmem>>, %arg3: memref<128x1xf32, #tpu.memory_space<vmem>>, %arg4: memref<128x128xf32, #tpu.memory_space<vmem>>, %arg5: memref<128x128xf32, #tpu.memory_space<vmem>>, %arg6: memref<128x128xf32, #tpu.memory_space<vmem>>, %arg7: memref<128x1xf32, #tpu.memory_space<vmem>>, %arg8: memref<1x512xf32, #tpu.memory_space<vmem>>) attributes {dimension_semantics = [#tpu.dimension_semantics<parallel>], iteration_bounds = array<i64: 2>, scalar_prefetch = 0 : i64, scratch_operands = 0 : i64, tpu.core_type = #tpu.core_type<tc>, window_params = [{transform_indices = @transform_0, window_bounds = array<i64: 1, 512>}, {pipeline_mode = #tpu.pipeline_mode<synchronous>, transform_indices = @transform_1, window_bounds = array<i64: 128, 1>}, {pipeline_mode = #tpu.pipeline_mode<synchronous>, transform_indices = @transform_2, window_bounds = array<i64: 128, 1>}, {pipeline_mode = #tpu.pipeline_mode<synchronous>, transform_indices = @transform_3, window_bounds = array<i64: 128, 128>}, {pipeline_mode = #tpu.pipeline_mode<synchronous>, transform_indices = @transform_4, window_bounds = array<i64: 128, 128>}, {pipeline_mode = #tpu.pipeline_mode<synchronous>, transform_indices = @transform_5, window_bounds = array<i64: 128, 128>}, {pipeline_mode = #tpu.pipeline_mode<synchronous>, transform_indices = @transform_6, window_bounds = array<i64: 128, 1>}, {transform_indices = @transform_7, window_bounds = array<i64: 1, 512>}]} {
    %c0 = arith.constant 0 : index
    %c0_0 = arith.constant 0 : index
    %0 = vector.load %arg1[%c0, %c0_0] : memref<1x512xf32, #tpu.memory_space<vmem>>, vector<1x512xf32>
    %c0_1 = arith.constant 0 : index
    %c0_2 = arith.constant 0 : index
    %1 = vector.load %arg2[%c0_1, %c0_2] : memref<128x1xf32, #tpu.memory_space<vmem>>, vector<128x1xf32>
    %2 = vector.broadcast %1 : vector<128x1xf32> to vector<128x512xf32>
    %3 = vector.broadcast %0 : vector<1x512xf32> to vector<128x512xf32>
    %4 = arith.mulf %2, %3 : vector<128x512xf32>
    %c0_3 = arith.constant 0 : index
    %c0_4 = arith.constant 0 : index
    %5 = vector.load %arg3[%c0_3, %c0_4] : memref<128x1xf32, #tpu.memory_space<vmem>>, vector<128x1xf32>
    %6 = vector.broadcast %5 : vector<128x1xf32> to vector<128x512xf32>
    %7 = arith.addf %4, %6 : vector<128x512xf32>
    %cst = arith.constant 0.000000e+00 : f32
    %8 = vector.broadcast %cst : f32 to vector<128x512xf32>
    %9 = arith.cmpf ogt, %7, %8 : vector<128x512xf32>
    %cst_5 = arith.constant 0.00999999977 : f32
    %10 = vector.broadcast %cst_5 : f32 to vector<128x512xf32>
    %11 = arith.mulf %10, %7 : vector<128x512xf32>
    %12 = arith.select %9, %7, %11 : vector<128x512xi1>, vector<128x512xf32>
    %c0_6 = arith.constant 0 : index
    %c0_7 = arith.constant 0 : index
    %13 = vector.load %arg4[%c0_6, %c0_7] : memref<128x128xf32, #tpu.memory_space<vmem>>, vector<128x128xf32>
    %cst_8 = arith.constant dense<0.000000e+00> : vector<128x512xf32>
    %14 = tpu.matmul %13, %12, %cst_8 {dimension_numbers = #tpu.dot_dimension_numbers<[1], [0], [0], [1], [0, 0, 1, 1], [], []>} : vector<128x128xf32>, vector<128x512xf32>, vector<128x512xf32> -> vector<128x512xf32>
    %cst_9 = arith.constant 0.000000e+00 : f32
    %15 = vector.broadcast %cst_9 : f32 to vector<128x512xf32>
    %16 = arith.cmpf ogt, %14, %15 : vector<128x512xf32>
    %cst_10 = arith.constant 0.00999999977 : f32
    %17 = vector.broadcast %cst_10 : f32 to vector<128x512xf32>
    %18 = arith.mulf %17, %14 : vector<128x512xf32>
    %19 = arith.select %16, %14, %18 : vector<128x512xi1>, vector<128x512xf32>
    %c0_11 = arith.constant 0 : index
    %c0_12 = arith.constant 0 : index
    %20 = vector.load %arg5[%c0_11, %c0_12] : memref<128x128xf32, #tpu.memory_space<vmem>>, vector<128x128xf32>
    %cst_13 = arith.constant dense<0.000000e+00> : vector<128x512xf32>
    %21 = tpu.matmul %20, %19, %cst_13 {dimension_numbers = #tpu.dot_dimension_numbers<[1], [0], [0], [1], [0, 0, 1, 1], [], []>} : vector<128x128xf32>, vector<128x512xf32>, vector<128x512xf32> -> vector<128x512xf32>
    %cst_14 = arith.constant 0.000000e+00 : f32
    %22 = vector.broadcast %cst_14 : f32 to vector<128x512xf32>
    %23 = arith.cmpf ogt, %21, %22 : vector<128x512xf32>
    %cst_15 = arith.constant 0.00999999977 : f32
    %24 = vector.broadcast %cst_15 : f32 to vector<128x512xf32>
    %25 = arith.mulf %24, %21 : vector<128x512xf32>
    %26 = arith.select %23, %21, %25 : vector<128x512xi1>, vector<128x512xf32>
    %c0_16 = arith.constant 0 : index
    %c0_17 = arith.constant 0 : index
    %27 = vector.load %arg6[%c0_16, %c0_17] : memref<128x128xf32, #tpu.memory_space<vmem>>, vector<128x128xf32>
    %cst_18 = arith.constant dense<0.000000e+00> : vector<128x512xf32>
    %28 = tpu.matmul %27, %26, %cst_18 {dimension_numbers = #tpu.dot_dimension_numbers<[1], [0], [0], [1], [0, 0, 1, 1], [], []>} : vector<128x128xf32>, vector<128x512xf32>, vector<128x512xf32> -> vector<128x512xf32>
    %cst_19 = arith.constant 0.000000e+00 : f32
    %29 = vector.broadcast %cst_19 : f32 to vector<128x512xf32>
    %30 = arith.cmpf ogt, %28, %29 : vector<128x512xf32>
    %cst_20 = arith.constant 0.00999999977 : f32
    %31 = vector.broadcast %cst_20 : f32 to vector<128x512xf32>
    %32 = arith.mulf %31, %28 : vector<128x512xf32>
    %33 = arith.select %30, %28, %32 : vector<128x512xi1>, vector<128x512xf32>
    %c0_21 = arith.constant 0 : index
    %c0_22 = arith.constant 0 : index
    %34 = vector.load %arg7[%c0_21, %c0_22] : memref<128x1xf32, #tpu.memory_space<vmem>>, vector<128x1xf32>
    %35 = vector.broadcast %34 : vector<128x1xf32> to vector<128x512xf32>
    %36 = arith.mulf %35, %33 : vector<128x512xf32>
    %cst_23 = arith.constant dense<0.000000e+00> : vector<512xf32>
    %37 = vector.multi_reduction <add>, %36, %cst_23 [0] : vector<128x512xf32> to vector<512xf32>
    %38 = vector.shape_cast %37 : vector<512xf32> to vector<1x512xf32>
    %c0_24 = arith.constant 0 : index
    %c0_25 = arith.constant 0 : index
    %39 = vector.load %arg8[%c0_24, %c0_25] : memref<1x512xf32, #tpu.memory_space<vmem>>, vector<1x512xf32>
    tpu.vector_store %arg8[%c0_24, %c0_25], %38 {strides = array<i32>} : memref<1x512xf32, #tpu.memory_space<vmem>>, vector<1x512xf32>,
    return
  }
  func.func @transform_0(%arg0: i32) -> (i32, i32) {
    %c0_i32 = arith.constant 0 : i32
    %c0_i32_0 = arith.constant 0 : i32
    return %c0_i32, %arg0 : i32, i32
  }
  func.func @transform_1(%arg0: i32) -> (i32, i32) {
    %c0_i32 = arith.constant 0 : i32
    %c0_i32_0 = arith.constant 0 : i32
    %c0_i32_1 = arith.constant 0 : i32
    return %c0_i32, %c0_i32_0 : i32, i32
  }
  func.func @transform_2(%arg0: i32) -> (i32, i32) {
    %c0_i32 = arith.constant 0 : i32
    %c0_i32_0 = arith.constant 0 : i32
    %c0_i32_1 = arith.constant 0 : i32
    return %c0_i32, %c0_i32_0 : i32, i32
  }
  func.func @transform_3(%arg0: i32) -> (i32, i32) {
    %c0_i32 = arith.constant 0 : i32
    %c0_i32_0 = arith.constant 0 : i32
    %c0_i32_1 = arith.constant 0 : i32
    return %c0_i32, %c0_i32_0 : i32, i32
  }
  func.func @transform_4(%arg0: i32) -> (i32, i32) {
    %c0_i32 = arith.constant 0 : i32
    %c0_i32_0 = arith.constant 0 : i32
    %c0_i32_1 = arith.constant 0 : i32
    return %c0_i32, %c0_i32_0 : i32, i32
  }
  func.func @transform_5(%arg0: i32) -> (i32, i32) {
    %c0_i32 = arith.constant 0 : i32
    %c0_i32_0 = arith.constant 0 : i32
    %c0_i32_1 = arith.constant 0 : i32
    return %c0_i32, %c0_i32_0 : i32, i32
  }
  func.func @transform_6(%arg0: i32) -> (i32, i32) {
    %c0_i32 = arith.constant 0 : i32
    %c0_i32_0 = arith.constant 0 : i32
    %c0_i32_1 = arith.constant 0 : i32
    return %c0_i32, %c0_i32_0 : i32, i32
  }
  func.func @transform_7(%arg0: i32) -> (i32, i32) {
    %c0_i32 = arith.constant 0 : i32
    %c0_i32_0 = arith.constant 0 : i32
    return %c0_i32, %arg0 : i32, i32
  }
}

</mosaic_0001>

<llo_original>
// kernel: fit_forward.1
$region0: #{fit_forward.1}
  #allocation0 [shape = 'u32[]', space=smem, size = 0x4, offset = 0x4, fixed_abs, tag = 'smem constant byte address 0x4 - core index']
  #allocation1 [shape = 'u32[144,128]{1,0:T(1,128)}', space=vmem, size = 0x12000, scoped, tag = 'internal scratch']
  %s0 = inlined_call_operand.hbm [shape: f32[1,1024], index: 0, kind: input, shape index: {}]
  %s1 = inlined_call_operand.vmem [shape: f32[128,1], index: 1, kind: input, shape index: {}]
  %s2 = inlined_call_operand.vmem [shape: f32[128,1], index: 2, kind: input, shape index: {}]
  %s3 = inlined_call_operand.vmem [shape: f32[128,128], index: 3, kind: input, shape index: {}]
  %s4 = inlined_call_operand.vmem [shape: f32[128,128], index: 4, kind: input, shape index: {}]
  %s5 = inlined_call_operand.vmem [shape: f32[128,128], index: 5, kind: input, shape index: {}]
  %s6 = inlined_call_operand.vmem [shape: f32[128,1], index: 6, kind: input, shape index: {}]
  %s7 = inlined_call_operand.hbm [shape: f32[1,1024], index: 7, kind: output, shape index: {}]
  %s8 = sld [smem:[#allocation0]]
  $region65: #{fit_forward.1} parent=0
    _
  %s10 = ssub.s32 1, %s8
  %s11 = scalar_select 0, %s10, %s8
  $region1: #{fit_forward.1} parent=0
    #allocation2 [shape = 'u8[4096]{0}', space=vmem, size = 0x1000, scoped, tag = 'input window, operand 0']
    #allocation3 [shape = 's32[2]{0}', space=sflag, size = 0x8, scoped, tag = 'scoped memory for fit_forward.1']
    #allocation4 [shape = 's32[2]{0}', space=sflag, size = 0x8, scoped, tag = 'scoped memory for fit_forward.1']
    #allocation5 [shape = 'u8[4096]{0}', space=vmem, size = 0x1000, scoped, tag = 'output window, operand 0']
    %12 = vsyncpa [#allocation3], 0
    %s13 = scalar_lea.sflag [#allocation3], 1
    %14 = vsyncpa %s13, 0
    %15 = vsyncpa [#allocation4], 0
    %s16 = scalar_lea.sflag [#allocation4], 1
    %17 = vsyncpa %s16, 0
    loop: start=0, step=1, limit=4
    $region2: #{fit_forward.1} parent=1 // loop_pre_header
      _
    $region3: #{fit_forward.1} parent=1 // loop_header
      %s19 = sphi 0, %s23
      %p20 = scmp.ge.s32.totalorder %s19, 4
      %s29 = sphi 0, %s31
      %s32 = sphi 0, %s29
      %s33 = sphi 0, %s32
      %s49 = sphi 0, %s33
      %s53 = sphi 0, %s53
      %s55 = sphi 0, %s53
      %s56 = sphi 0, %s55
      %s70 = sphi 0, %s56
      %s74 = sphi 0, %s74
      %s76 = sphi 0, %s74
      %s77 = sphi 0, %s76
      %s91 = sphi 0, %s77
      %s95 = sphi 0, %s95
      %s97 = sphi 0, %s95
      %s98 = sphi 0, %s97
      %s112 = sphi 0, %s98
      %s116 = sphi 0, %s116
      %s118 = sphi 0, %s116
      %s119 = sphi 0, %s118
      %s133 = sphi 0, %s119
      %s137 = sphi 0, %s137
      %s139 = sphi 0, %s137
      %s140 = sphi 0, %s139
      %s154 = sphi 0, %s140
      %s158 = sphi 0, %s158
      %s160 = sphi 0, %s158
      %s161 = sphi 0, %s160
      %s175 = sphi 0, %s161
      %s181 = sphi 0, %s183
      %s184 = sphi 0, %s181
      %s185 = sphi 0, %s184
      %s201 = sphi 0, %s185
    $region4: #{fit_forward.1} parent=1 // loop_header_branch
      %22 = sbr.rel (%p20) target = $region8
    $region5: #{fit_forward.1} parent=1 // loop_body
      %s24 = ssub.s32 %s19, 1
      %s25 = ssub.s32 %s19, 2
      %s26 = sadd.s32 %s19, 1
      %s27 = ssub.s32 %s19, %s26
      %p28 = scmp.eq.s32.totalorder %s27, 0
      %s30 = sadd.s32 %s29, 1
      %s31 = scalar_select %p28, %s29, %s30
      %p34 = pneg %p28
      %p35 = scmp.eq.s32.totalorder %s19, 1
      %p36 = por %p34, %p35
      %p37 = scmp.ne.s32.totalorder %s29, %s32
      %p38 = scmp.eq.s32.totalorder %s19, 0
      %p39 = por %p37, %p38
      %p40 = scmp.ne.s32.totalorder %s29, %s32
      %p41 = scmp.eq.s32.totalorder %s24, 1
      %p42 = por %p40, %p41
      %p43 = scmp.ne.s32.totalorder %s32, %s33
      %p44 = scmp.eq.s32.totalorder %s24, 0
      %p45 = por %p43, %p44
      %p46 = scmp.ne.s32.totalorder %s32, %s33
      %p47 = scmp.eq.s32.totalorder %s25, 1
      %p48 = por %p46, %p47
      %p50 = scmp.ne.s32.totalorder %s33, %s49
      %p51 = scmp.eq.s32.totalorder %s25, 0
      %p52 = por %p50, %p51
      %s54 = sadd.s32 %s53, 1
      %p57 = scmp.eq.s32.totalorder %s19, 1
      %p58 = scmp.ne.s32.totalorder %s53, %s55
      %p59 = scmp.eq.s32.totalorder %s19, 0
      %p60 = por %p58, %p59
      %p61 = scmp.ne.s32.totalorder %s53, %s55
      %p62 = scmp.eq.s32.totalorder %s24, 1
      %p63 = por %p61, %p62
      %p64 = scmp.ne.s32.totalorder %s55, %s56
      %p65 = scmp.eq.s32.totalorder %s24, 0
      %p66 = por %p64, %p65
      %p67 = scmp.ne.s32.totalorder %s55, %s56
      %p68 = scmp.eq.s32.totalorder %s25, 1
      %p69 = por %p67, %p68
      %p71 = scmp.ne.s32.totalorder %s56, %s70
      %p72 = scmp.eq.s32.totalorder %s25, 0
      %p73 = por %p71, %p72
      %s75 = sadd.s32 %s74, 1
      %p78 = scmp.eq.s32.totalorder %s19, 1
      %p79 = scmp.ne.s32.totalorder %s74, %s76
      %p80 = scmp.eq.s32.totalorder %s19, 0
      %p81 = por %p79, %p80
      %p82 = scmp.ne.s32.totalorder %s74, %s76
      %p83 = scmp.eq.s32.totalorder %s24, 1
      %p84 = por %p82, %p83
      %p85 = scmp.ne.s32.totalorder %s76, %s77
      %p86 = scmp.eq.s32.totalorder %s24, 0
      %p87 = por %p85, %p86
      %p88 = scmp.ne.s32.totalorder %s76, %s77
      %p89 = scmp.eq.s32.totalorder %s25, 1
      %p90 = por %p88, %p89
      %p92 = scmp.ne.s32.totalorder %s77, %s91
      %p93 = scmp.eq.s32.totalorder %s25, 0
      %p94 = por %p92, %p93
      %s96 = sadd.s32 %s95, 1
      %p99 = scmp.eq.s32.totalorder %s19, 1
      %p100 = scmp.ne.s32.totalorder %s95, %s97
      %p101 = scmp.eq.s32.totalorder %s19, 0
      %p102 = por %p100, %p101
      %p103 = scmp.ne.s32.totalorder %s95, %s97
      %p104 = scmp.eq.s32.totalorder %s24, 1
      %p105 = por %p103, %p104
      %p106 = scmp.ne.s32.totalorder %s97, %s98
      %p107 = scmp.eq.s32.totalorder %s24, 0
      %p108 = por %p106, %p107
      %p109 = scmp.ne.s32.totalorder %s97, %s98
      %p110 = scmp.eq.s32.totalorder %s25, 1
      %p111 = por %p109, %p110
      %p113 = scmp.ne.s32.totalorder %s98, %s112
      %p114 = scmp.eq.s32.totalorder %s25, 0
      %p115 = por %p113, %p114
      %s117 = sadd.s32 %s116, 1
      %p120 = scmp.eq.s32.totalorder %s19, 1
      %p121 = scmp.ne.s32.totalorder %s116, %s118
      %p122 = scmp.eq.s32.totalorder %s19, 0
      %p123 = por %p121, %p122
      %p124 = scmp.ne.s32.totalorder %s116, %s118
      %p125 = scmp.eq.s32.totalorder %s24, 1
      %p126 = por %p124, %p125
      %p127 = scmp.ne.s32.totalorder %s118, %s119
      %p128 = scmp.eq.s32.totalorder %s24, 0
      %p129 = por %p127, %p128
      %p130 = scmp.ne.s32.totalorder %s118, %s119
      %p131 = scmp.eq.s32.totalorder %s25, 1
      %p132 = por %p130, %p131
      %p134 = scmp.ne.s32.totalorder %s119, %s133
      %p135 = scmp.eq.s32.totalorder %s25, 0
      %p136 = por %p134, %p135
      %s138 = sadd.s32 %s137, 1
      %p141 = scmp.eq.s32.totalorder %s19, 1
      %p142 = scmp.ne.s32.totalorder %s137, %s139
      %p143 = scmp.eq.s32.totalorder %s19, 0
      %p144 = por %p142, %p143
      %p145 = scmp.ne.s32.totalorder %s137, %s139
      %p146 = scmp.eq.s32.totalorder %s24, 1
      %p147 = por %p145, %p146
      %p148 = scmp.ne.s32.totalorder %s139, %s140
      %p149 = scmp.eq.s32.totalorder %s24, 0
      %p150 = por %p148, %p149
      %p151 = scmp.ne.s32.totalorder %s139, %s140
      %p152 = scmp.eq.s32.totalorder %s25, 1
      %p153 = por %p151, %p152
      %p155 = scmp.ne.s32.totalorder %s140, %s154
      %p156 = scmp.eq.s32.totalorder %s25, 0
      %p157 = por %p155, %p156
      %s159 = sadd.s32 %s158, 1
      %p162 = scmp.eq.s32.totalorder %s19, 1
      %p163 = scmp.ne.s32.totalorder %s158, %s160
      %p164 = scmp.eq.s32.totalorder %s19, 0
      %p165 = por %p163, %p164
      %p166 = scmp.ne.s32.totalorder %s158, %s160
      %p167 = scmp.eq.s32.totalorder %s24, 1
      %p168 = por %p166, %p167
      %p169 = scmp.ne.s32.totalorder %s160, %s161
      %p170 = scmp.eq.s32.totalorder %s24, 0
      %p171 = por %p169, %p170
      %p172 = scmp.ne.s32.totalorder %s160, %s161
      %p173 = scmp.eq.s32.totalorder %s25, 1
      %p174 = por %p172, %p173
      %p176 = scmp.ne.s32.totalorder %s161, %s175
      %p177 = scmp.eq.s32.totalorder %s25, 0
      %p178 = por %p176, %p177
      %s179 = ssub.s32 %s19, %s26
      %p180 = scmp.eq.s32.totalorder %s179, 0
      %s182 = sadd.s32 %s181, 1
      %s183 = scalar_select %p180, %s181, %s182
      %p186 = pneg %p180
      %p187 = scmp.eq.s32.totalorder %s19, 1
      %p188 = por %p186, %p187
      %p189 = scmp.ne.s32.totalorder %s181, %s184
      %p190 = scmp.eq.s32.totalorder %s19, 0
      %p191 = por %p189, %p190
      %p192 = scmp.ne.s32.totalorder %s181, %s184
      %p193 = scmp.eq.s32.totalorder %s24, 1
      %p194 = por %p192, %p193
      %p195 = scmp.ne.s32.totalorder %s184, %s185
      %p196 = scmp.eq.s32.totalorder %s24, 0
      %p197 = por %p195, %p196
      %p198 = scmp.ne.s32.totalorder %s184, %s185
      %p199 = scmp.eq.s32.totalorder %s25, 1
      %p200 = por %p198, %p199
      %p202 = scmp.ne.s32.totalorder %s185, %s201
      %p203 = scmp.eq.s32.totalorder %s25, 0
      %p204 = por %p202, %p203
      %p205 = scmp.le.s32.totalorder 1, %s19
      %p206 = scmp.lt.s32.totalorder %s19, 3
      %p207 = pnand %p205, %p206
      %p208 = pneg %p207
      // Predicated region
      $region9: #{fit_forward.1} parent=5 // pred_check
        _
      $region10: #{fit_forward.1} parent=5 // pred_check_branch
        %210 = sbr.rel (%p207) target = $region12
      $region11: #{fit_forward.1} parent=5 // pred_region
        %s211 = ssub.s32 %s19, 1
        // Predicated region
        $region13: #{fit_forward.1} parent=11 // pred_check
          %p212 = pneg %p66
        $region14: #{fit_forward.1} parent=11 // pred_check_branch
          %214 = sbr.rel (%p212) target = $region16
        $region15: #{fit_forward.1} parent=11 // pred_region
          _
        $region16: #{fit_forward.1} parent=11 // pred_fallthru
          _
        // Predicated region
        $region17: #{fit_forward.1} parent=11 // pred_check
          %p215 = pneg %p87
        $region18: #{fit_forward.1} parent=11 // pred_check_branch
          %217 = sbr.rel (%p215) target = $region20
        $region19: #{fit_forward.1} parent=11 // pred_region
          _
        $region20: #{fit_forward.1} parent=11 // pred_fallthru
          _
        // Predicated region
        $region21: #{fit_forward.1} parent=11 // pred_check
          %p218 = pneg %p108
        $region22: #{fit_forward.1} parent=11 // pred_check_branch
          %220 = sbr.rel (%p218) target = $region24
        $region23: #{fit_forward.1} parent=11 // pred_region
          _
        $region24: #{fit_forward.1} parent=11 // pred_fallthru
          _
        // Predicated region
        $region25: #{fit_forward.1} parent=11 // pred_check
          %p221 = pneg %p129
        $region26: #{fit_forward.1} parent=11 // pred_check_branch
          %223 = sbr.rel (%p221) target = $region28
        $region27: #{fit_forward.1} parent=11 // pred_region
          _
        $region28: #{fit_forward.1} parent=11 // pred_fallthru
          _
        // Predicated region
        $region29: #{fit_forward.1} parent=11 // pred_check
          %p224 = pneg %p150
        $region30: #{fit_forward.1} parent=11 // pred_check_branch
          %226 = sbr.rel (%p224) target = $region32
        $region31: #{fit_forward.1} parent=11 // pred_region
          _
        $region32: #{fit_forward.1} parent=11 // pred_fallthru
          _
        // Predicated region
        $region33: #{fit_forward.1} parent=11 // pred_check
          %p227 = pneg %p171
        $region34: #{fit_forward.1} parent=11 // pred_check_branch
          %229 = sbr.rel (%p227) target = $region36
        $region35: #{fit_forward.1} parent=11 // pred_region
          _
        $region36: #{fit_forward.1} parent=11 // pred_fallthru
          _
      $region12: #{fit_forward.1} parent=5 // pred_fallthru
        _
      %p230 = scmp.lt.s32.totalorder %s19, 2
      // Predicated region
      $region37: #{fit_forward.1} parent=5 // pred_check
        %p231 = pneg %p230
      $region38: #{fit_forward.1} parent=5 // pred_check_branch
        %233 = sbr.rel (%p231) target = $region40
      $region39: #{fit_forward.1} parent=5 // pred_region
        // Predicated region
        $region41: #{fit_forward.1} parent=39 // pred_check
          %p234 = pneg %p39
        $region42: #{fit_forward.1} parent=39 // pred_check_branch
          %236 = sbr.rel (%p234) target = $region44
        $region43: #{fit_forward.1} parent=39 // pred_region
          %s237 = sand.u32 %s29, 1
          %s238 = scalar_lea.sflag [#allocation3], %s237
          %s239 = sand.u32 %s29, 1
          %s240 = smul.addr %s239, 4
          %s241 = scalar_lea.vmem [#allocation2], %s240
          %s242 = smul.u32 4, %s19
          %s244 = ssub.s32 64, 64
          %245 = vsyncadd %s238, %s244
          %s246 = smul.addr %s242, 16
          %s247 = scalar_lea.hbm %s0, %s246
          %s249 = sshll.u32 %s241, 4
          %s250 = int_to_ptr.vmem [resolvable:$true] %s249
          %252 = dma.hbm_to_vmem [thread:$0]  %s247, 64, %s250, %s238
        $region44: #{fit_forward.1} parent=39 // pred_fallthru
          _
      $region40: #{fit_forward.1} parent=5 // pred_fallthru
        _
      %p253 = scmp.le.s32.totalorder 1, %s19
      %p254 = scmp.lt.s32.totalorder %s19, 3
      %p255 = pnand %p253, %p254
      %p256 = pneg %p255
      // Predicated region
      $region45: #{fit_forward.1} parent=5 // pred_check
        _
      $region46: #{fit_forward.1} parent=5 // pred_check_branch
        %258 = sbr.rel (%p255) target = $region48
      $region47: #{fit_forward.1} parent=5 // pred_region
        %s259 = ssub.s32 %s19, 1
        %s260 = sand.u32 %s32, 1
        %s261 = scalar_lea.sflag [#allocation3], %s260
        %s262 = sand.u32 %s32, 1
        %s263 = smul.addr %s262, 4
        %s264 = scalar_lea.vmem [#allocation2], %s263
        // Predicated region
        $region49: #{fit_forward.1} parent=47 // pred_check
          %p265 = pneg %p45
        $region50: #{fit_forward.1} parent=47 // pred_check_branch
          %267 = sbr.rel (%p265) target = $region52
        $region51: #{fit_forward.1} parent=47 // pred_region
          %268 = dma.done %s261, 64
        $region52: #{fit_forward.1} parent=47 // pred_fallthru
          _
        %s269 = sand.u32 %s32, 1
        %s270 = scalar_lea.sflag [#allocation3], %s269
        %s271 = sand.u32 %s32, 1
        %s272 = smul.addr %s271, 4
        %s273 = scalar_lea.vmem [#allocation2], %s272
        %p274 = pneg %p45
        %p275 = pneg %p42
        %p276 = pneg %p66
        %p277 = pneg %p63
        %p278 = pneg %p87
        %p279 = pneg %p84
        %p280 = pneg %p108
        %p281 = pneg %p105
        %p282 = pneg %p129
        %p283 = pneg %p126
        %p284 = pneg %p150
        %p285 = pneg %p147
        %p286 = pneg %p171
        %p287 = pneg %p168
        %p288 = pneg %p197
        %p289 = pneg %p194
        %s290 = sand.u32 %s184, 1
        %s291 = scalar_lea.sflag [#allocation4], %s290
        %s292 = sand.u32 %s184, 1
        %s293 = smul.addr %s292, 4
        %s294 = scalar_lea.vmem [#allocation5], %s293
        %s295 = smul.u32 4, %s24
        %s296 = smul.u32 4, %s24
        %v297 = vld [vmem:[%s264] sm:$0xf]
        %v298 = vld [vmem:[%s1] sm:$0xff]
        %v299 = vld [vmem:[%s1 + $0x8] sm:$0xff]
        %v300 = vld [vmem:[%s1 + $0x10] sm:$0xff]
        %v301 = vld [vmem:[%s1 + $0x18] sm:$0xff]
        %v302 = vld [vmem:[%s1 + $0x20] sm:$0xff]
        %v303 = vld [vmem:[%s1 + $0x28] sm:$0xff]
        %v304 = vld [vmem:[%s1 + $0x30] sm:$0xff]
        %v305 = vld [vmem:[%s1 + $0x38] sm:$0xff]
        %v306 = vld [vmem:[%s1 + $0x40] sm:$0xff]
        %v307 = vld [vmem:[%s1 + $0x48] sm:$0xff]
        %v308 = vld [vmem:[%s1 + $0x50] sm:$0xff]
        %v309 = vld [vmem:[%s1 + $0x58] sm:$0xff]
        %v310 = vld [vmem:[%s1 + $0x60] sm:$0xff]
        %v311 = vld [vmem:[%s1 + $0x68] sm:$0xff]
        %v312 = vld [vmem:[%s1 + $0x70] sm:$0xff]
        %v313 = vld [vmem:[%s1 + $0x78] sm:$0xff]
        %315 = vset.pattern.permute.xlu0 0
        %316 = vperm.xlu0 %315, %v298
        %v317 = vpop.permute.xlu0 %316
        %320 = vset.pattern.permute.xlu0 0
        %321 = vperm.xlu0 %320, %v299
        %v322 = vpop.permute.xlu0 %321
        %325 = vset.pattern.permute.xlu0 0
        %326 = vperm.xlu0 %325, %v300
        %v327 = vpop.permute.xlu0 %326
        %330 = vset.pattern.permute.xlu0 0
        %331 = vperm.xlu0 %330, %v301
        %v332 = vpop.permute.xlu0 %331
        %335 = vset.pattern.permute.xlu0 0
        %336 = vperm.xlu0 %335, %v302
        %v337 = vpop.permute.xlu0 %336
        %340 = vset.pattern.permute.xlu0 0
        %341 = vperm.xlu0 %340, %v303
        %v342 = vpop.permute.xlu0 %341
        %345 = vset.pattern.permute.xlu0 0
        %346 = vperm.xlu0 %345, %v304
        %v347 = vpop.permute.xlu0 %346
        %350 = vset.pattern.permute.xlu0 0
        %351 = vperm.xlu0 %350, %v305
        %v352 = vpop.permute.xlu0 %351
        %355 = vset.pattern.permute.xlu0 0
        %356 = vperm.xlu0 %355, %v306
        %v357 = vpop.permute.xlu0 %356
        %360 = vset.pattern.permute.xlu0 0
        %361 = vperm.xlu0 %360, %v307
        %v362 = vpop.permute.xlu0 %361
        %365 = vset.pattern.permute.xlu0 0
        %366 = vperm.xlu0 %365, %v308
        %v367 = vpop.permute.xlu0 %366
        %370 = vset.pattern.permute.xlu0 0
        %371 = vperm.xlu0 %370, %v309
        %v372 = vpop.permute.xlu0 %371
        %375 = vset.pattern.permute.xlu0 0
        %376 = vperm.xlu0 %375, %v310
        %v377 = vpop.permute.xlu0 %376
        %380 = vset.pattern.permute.xlu0 0
        %381 = vperm.xlu0 %380, %v311
        %v382 = vpop.permute.xlu0 %381
        %385 = vset.pattern.permute.xlu0 0
        %386 = vperm.xlu0 %385, %v312
        %v387 = vpop.permute.xlu0 %386
        %390 = vset.pattern.permute.xlu0 0
        %391 = vperm.xlu0 %390, %v313
        %v392 = vpop.permute.xlu0 %391
        %v395 = vlaneseq
        %v396 = vshrl.u32 %v395, 7
        %v397 = vsub.s32 0, %v396
        %v398 = vrot.slane %v297, %v397
        %v399 = vlaneseq
        %v400 = vshrl.u32 %v399, 7
        %v401 = vsub.s32 1, %v400
        %v402 = vrot.slane %v297, %v401
        %v403 = vlaneseq
        %v404 = vshrl.u32 %v403, 7
        %v405 = vsub.s32 2, %v404
        %v406 = vrot.slane %v297, %v405
        %v407 = vlaneseq
        %v408 = vshrl.u32 %v407, 7
        %v409 = vsub.s32 3, %v408
        %v410 = vrot.slane %v297, %v409
        %v415 = vmul.f32 %v317, %v398
        %v416 = vmul.f32 %v317, %v402
        %v417 = vmul.f32 %v317, %v406
        %v418 = vmul.f32 %v317, %v410
        %v419 = vmul.f32 %v322, %v398
        %v420 = vmul.f32 %v322, %v402
        %v421 = vmul.f32 %v322, %v406
        %v422 = vmul.f32 %v322, %v410
        %v423 = vmul.f32 %v327, %v398
        %v424 = vmul.f32 %v327, %v402
        %v425 = vmul.f32 %v327, %v406
        %v426 = vmul.f32 %v327, %v410
        %v427 = vmul.f32 %v332, %v398
        %v428 = vmul.f32 %v332, %v402
        %v429 = vmul.f32 %v332, %v406
        %v430 = vmul.f32 %v332, %v410
        %v431 = vmul.f32 %v337, %v398
        %v432 = vmul.f32 %v337, %v402
        %v433 = vmul.f32 %v337, %v406
        %v434 = vmul.f32 %v337, %v410
        %v435 = vmul.f32 %v342, %v398
        %v436 = vmul.f32 %v342, %v402
        %v437 = vmul.f32 %v342, %v406
        %v438 = vmul.f32 %v342, %v410
        %v439 = vmul.f32 %v347, %v398
        %v440 = vmul.f32 %v347, %v402
        %v441 = vmul.f32 %v347, %v406
        %v442 = vmul.f32 %v347, %v410
        %v443 = vmul.f32 %v352, %v398
        %v444 = vmul.f32 %v352, %v402
        %v445 = vmul.f32 %v352, %v406
        %v446 = vmul.f32 %v352, %v410
        %v447 = vmul.f32 %v357, %v398
        %v448 = vmul.f32 %v357, %v402
        %v449 = vmul.f32 %v357, %v406
        %v450 = vmul.f32 %v357, %v410
        %v451 = vmul.f32 %v362, %v398
        %v452 = vmul.f32 %v362, %v402
        %v453 = vmul.f32 %v362, %v406
        %v454 = vmul.f32 %v362, %v410
        %v455 = vmul.f32 %v367, %v398
        %v456 = vmul.f32 %v367, %v402
        %v457 = vmul.f32 %v367, %v406
        %v458 = vmul.f32 %v367, %v410
        %v459 = vmul.f32 %v372, %v398
        %v460 = vmul.f32 %v372, %v402
        %v461 = vmul.f32 %v372, %v406
        %v462 = vmul.f32 %v372, %v410
        %v463 = vmul.f32 %v377, %v398
        %v464 = vmul.f32 %v377, %v402
        %v465 = vmul.f32 %v377, %v406
        %v466 = vmul.f32 %v377, %v410
        %v467 = vmul.f32 %v382, %v398
        %v468 = vmul.f32 %v382, %v402
        %v469 = vmul.f32 %v382, %v406
        %v470 = vmul.f32 %v382, %v410
        %v471 = vmul.f32 %v387, %v398
        %v472 = vmul.f32 %v387, %v402
        %v473 = vmul.f32 %v387, %v406
        %v474 = vmul.f32 %v387, %v410
        %v475 = vmul.f32 %v392, %v398
        %v476 = vmul.f32 %v392, %v402
        %v477 = vmul.f32 %v392, %v406
        %v478 = vmul.f32 %v392, %v410
        %v479 = vld [vmem:[%s2] sm:$0xff]
        %v480 = vld [vmem:[%s2 + $0x8] sm:$0xff]
        %v481 = vld [vmem:[%s2 + $0x10] sm:$0xff]
        %v482 = vld [vmem:[%s2 + $0x18] sm:$0xff]
        %v483 = vld [vmem:[%s2 + $0x20] sm:$0xff]
        %v484 = vld [vmem:[%s2 + $0x28] sm:$0xff]
        %v485 = vld [vmem:[%s2 + $0x30] sm:$0xff]
        %v486 = vld [vmem:[%s2 + $0x38] sm:$0xff]
        %v487 = vld [vmem:[%s2 + $0x40] sm:$0xff]
        %v488 = vld [vmem:[%s2 + $0x48] sm:$0xff]
        %v489 = vld [vmem:[%s2 + $0x50] sm:$0xff]
        %v490 = vld [vmem:[%s2 + $0x58] sm:$0xff]
        %v491 = vld [vmem:[%s2 + $0x60] sm:$0xff]
        %v492 = vld [vmem:[%s2 + $0x68] sm:$0xff]
        %v493 = vld [vmem:[%s2 + $0x70] sm:$0xff]
        %v494 = vld [vmem:[%s2 + $0x78] sm:$0xff]
        %496 = vset.pattern.permute.xlu0 0
        %497 = vperm.xlu0 %496, %v479
        %v498 = vpop.permute.xlu0 %497
        %501 = vset.pattern.permute.xlu0 0
        %502 = vperm.xlu0 %501, %v480
        %v503 = vpop.permute.xlu0 %502
        %506 = vset.pattern.permute.xlu0 0
        %507 = vperm.xlu0 %506, %v481
        %v508 = vpop.permute.xlu0 %507
        %511 = vset.pattern.permute.xlu0 0
        %512 = vperm.xlu0 %511, %v482
        %v513 = vpop.permute.xlu0 %512
        %516 = vset.pattern.permute.xlu0 0
        %517 = vperm.xlu0 %516, %v483
        %v518 = vpop.permute.xlu0 %517
        %521 = vset.pattern.permute.xlu0 0
        %522 = vperm.xlu0 %521, %v484
        %v523 = vpop.permute.xlu0 %522
        %526 = vset.pattern.permute.xlu0 0
        %527 = vperm.xlu0 %526, %v485
        %v528 = vpop.permute.xlu0 %527
        %531 = vset.pattern.permute.xlu0 0
        %532 = vperm.xlu0 %531, %v486
        %v533 = vpop.permute.xlu0 %532
        %536 = vset.pattern.permute.xlu0 0
        %537 = vperm.xlu0 %536, %v487
        %v538 = vpop.permute.xlu0 %537
        %541 = vset.pattern.permute.xlu0 0
        %542 = vperm.xlu0 %541, %v488
        %v543 = vpop.permute.xlu0 %542
        %546 = vset.pattern.permute.xlu0 0
        %547 = vperm.xlu0 %546, %v489
        %v548 = vpop.permute.xlu0 %547
        %551 = vset.pattern.permute.xlu0 0
        %552 = vperm.xlu0 %551, %v490
        %v553 = vpop.permute.xlu0 %552
        %556 = vset.pattern.permute.xlu0 0
        %557 = vperm.xlu0 %556, %v491
        %v558 = vpop.permute.xlu0 %557
        %561 = vset.pattern.permute.xlu0 0
        %562 = vperm.xlu0 %561, %v492
        %v563 = vpop.permute.xlu0 %562
        %566 = vset.pattern.permute.xlu0 0
        %567 = vperm.xlu0 %566, %v493
        %v568 = vpop.permute.xlu0 %567
        %571 = vset.pattern.permute.xlu0 0
        %572 = vperm.xlu0 %571, %v494
        %v573 = vpop.permute.xlu0 %572
        %v575 = vadd.f32 %v415, %v498
        %v576 = vadd.f32 %v416, %v498
        %v577 = vadd.f32 %v417, %v498
        %v578 = vadd.f32 %v418, %v498
        %v579 = vadd.f32 %v419, %v503
        %v580 = vadd.f32 %v420, %v503
        %v581 = vadd.f32 %v421, %v503
        %v582 = vadd.f32 %v422, %v503
        %v583 = vadd.f32 %v423, %v508
        %v584 = vadd.f32 %v424, %v508
        %v585 = vadd.f32 %v425, %v508
        %v586 = vadd.f32 %v426, %v508
        %v587 = vadd.f32 %v427, %v513
        %v588 = vadd.f32 %v428, %v513
        %v589 = vadd.f32 %v429, %v513
        %v590 = vadd.f32 %v430, %v513
        %v591 = vadd.f32 %v431, %v518
        %v592 = vadd.f32 %v432, %v518
        %v593 = vadd.f32 %v433, %v518
        %v594 = vadd.f32 %v434, %v518
        %v595 = vadd.f32 %v435, %v523
        %v596 = vadd.f32 %v436, %v523
        %v597 = vadd.f32 %v437, %v523
        %v598 = vadd.f32 %v438, %v523
        %v599 = vadd.f32 %v439, %v528
        %v600 = vadd.f32 %v440, %v528
        %v601 = vadd.f32 %v441, %v528
        %v602 = vadd.f32 %v442, %v528
        %v603 = vadd.f32 %v443, %v533
        %v604 = vadd.f32 %v444, %v533
        %v605 = vadd.f32 %v445, %v533
        %v606 = vadd.f32 %v446, %v533
        %v607 = vadd.f32 %v447, %v538
        %v608 = vadd.f32 %v448, %v538
        %v609 = vadd.f32 %v449, %v538
        %v610 = vadd.f32 %v450, %v538
        %v611 = vadd.f32 %v451, %v543
        %v612 = vadd.f32 %v452, %v543
        %v613 = vadd.f32 %v453, %v543
        %v614 = vadd.f32 %v454, %v543
        %v615 = vadd.f32 %v455, %v548
        %v616 = vadd.f32 %v456, %v548
        %v617 = vadd.f32 %v457, %v548
        %v618 = vadd.f32 %v458, %v548
        %v619 = vadd.f32 %v459, %v553
        %v620 = vadd.f32 %v460, %v553
        %v621 = vadd.f32 %v461, %v553
        %v622 = vadd.f32 %v462, %v553
        %v623 = vadd.f32 %v463, %v558
        %v624 = vadd.f32 %v464, %v558
        %v625 = vadd.f32 %v465, %v558
        %v626 = vadd.f32 %v466, %v558
        %v627 = vadd.f32 %v467, %v563
        %v628 = vadd.f32 %v468, %v563
        %v629 = vadd.f32 %v469, %v563
        %v630 = vadd.f32 %v470, %v563
        %v631 = vadd.f32 %v471, %v568
        %v632 = vadd.f32 %v472, %v568
        %v633 = vadd.f32 %v473, %v568
        %v634 = vadd.f32 %v474, %v568
        %v635 = vadd.f32 %v475, %v573
        %v636 = vadd.f32 %v476, %v573
        %v637 = vadd.f32 %v477, %v573
        %v638 = vadd.f32 %v478, %v573
        %vm639 = vcmp.gt.f32.partialorder %v575, 0.0
        %vm640 = vcmp.gt.f32.partialorder %v576, 0.0
        %vm641 = vcmp.gt.f32.partialorder %v577, 0.0
        %vm642 = vcmp.gt.f32.partialorder %v578, 0.0
        %vm643 = vcmp.gt.f32.partialorder %v579, 0.0
        %vm644 = vcmp.gt.f32.partialorder %v580, 0.0
        %vm645 = vcmp.gt.f32.partialorder %v581, 0.0
        %vm646 = vcmp.gt.f32.partialorder %v582, 0.0
        %vm647 = vcmp.gt.f32.partialorder %v583, 0.0
        %vm648 = vcmp.gt.f32.partialorder %v584, 0.0
        %vm649 = vcmp.gt.f32.partialorder %v585, 0.0
        %vm650 = vcmp.gt.f32.partialorder %v586, 0.0
        %vm651 = vcmp.gt.f32.partialorder %v587, 0.0
        %vm652 = vcmp.gt.f32.partialorder %v588, 0.0
        %vm653 = vcmp.gt.f32.partialorder %v589, 0.0
        %vm654 = vcmp.gt.f32.partialorder %v590, 0.0
        %vm655 = vcmp.gt.f32.partialorder %v591, 0.0
        %vm656 = vcmp.gt.f32.partialorder %v592, 0.0
        %vm657 = vcmp.gt.f32.partialorder %v593, 0.0
        %vm658 = vcmp.gt.f32.partialorder %v594, 0.0
        %vm659 = vcmp.gt.f32.partialorder %v595, 0.0
        %vm660 = vcmp.gt.f32.partialorder %v596, 0.0
        %vm661 = vcmp.gt.f32.partialorder %v597, 0.0
        %vm662 = vcmp.gt.f32.partialorder %v598, 0.0
        %vm663 = vcmp.gt.f32.partialorder %v599, 0.0
        %vm664 = vcmp.gt.f32.partialorder %v600, 0.0
        %vm665 = vcmp.gt.f32.partialorder %v601, 0.0
        %vm666 = vcmp.gt.f32.partialorder %v602, 0.0
        %vm667 = vcmp.gt.f32.partialorder %v603, 0.0
        %vm668 = vcmp.gt.f32.partialorder %v604, 0.0
        %vm669 = vcmp.gt.f32.partialorder %v605, 0.0
        %vm670 = vcmp.gt.f32.partialorder %v606, 0.0
        %vm671 = vcmp.gt.f32.partialorder %v607, 0.0
        %vm672 = vcmp.gt.f32.partialorder %v608, 0.0
        %vm673 = vcmp.gt.f32.partialorder %v609, 0.0
        %vm674 = vcmp.gt.f32.partialorder %v610, 0.0
        %vm675 = vcmp.gt.f32.partialorder %v611, 0.0
        %vm676 = vcmp.gt.f32.partialorder %v612, 0.0
        %vm677 = vcmp.gt.f32.partialorder %v613, 0.0
        %vm678 = vcmp.gt.f32.partialorder %v614, 0.0
        %vm679 = vcmp.gt.f32.partialorder %v615, 0.0
        %vm680 = vcmp.gt.f32.partialorder %v616, 0.0
        %vm681 = vcmp.gt.f32.partialorder %v617, 0.0
        %vm682 = vcmp.gt.f32.partialorder %v618, 0.0
        %vm683 = vcmp.gt.f32.partialorder %v619, 0.0
        %vm684 = vcmp.gt.f32.partialorder %v620, 0.0
        %vm685 = vcmp.gt.f32.partialorder %v621, 0.0
        %vm686 = vcmp.gt.f32.partialorder %v622, 0.0
        %vm687 = vcmp.gt.f32.partialorder %v623, 0.0
        %vm688 = vcmp.gt.f32.partialorder %v624, 0.0
        %vm689 = vcmp.gt.f32.partialorder %v625, 0.0
        %vm690 = vcmp.gt.f32.partialorder %v626, 0.0
        %vm691 = vcmp.gt.f32.partialorder %v627, 0.0
        %vm692 = vcmp.gt.f32.partialorder %v628, 0.0
        %vm693 = vcmp.gt.f32.partialorder %v629, 0.0
        %vm694 = vcmp.gt.f32.partialorder %v630, 0.0
        %vm695 = vcmp.gt.f32.partialorder %v631, 0.0
        %vm696 = vcmp.gt.f32.partialorder %v632, 0.0
        %vm697 = vcmp.gt.f32.partialorder %v633, 0.0
        %vm698 = vcmp.gt.f32.partialorder %v634, 0.0
        %vm699 = vcmp.gt.f32.partialorder %v635, 0.0
        %vm700 = vcmp.gt.f32.partialorder %v636, 0.0
        %vm701 = vcmp.gt.f32.partialorder %v637, 0.0
        %vm702 = vcmp.gt.f32.partialorder %v638, 0.0
        %v703 = vmul.f32 %v575, 0.01
        %v704 = vmul.f32 %v576, 0.01
        %v705 = vmul.f32 %v577, 0.01
        %v706 = vmul.f32 %v578, 0.01
        %v707 = vmul.f32 %v579, 0.01
        %v708 = vmul.f32 %v580, 0.01
        %v709 = vmul.f32 %v581, 0.01
        %v710 = vmul.f32 %v582, 0.01
        %v711 = vmul.f32 %v583, 0.01
        %v712 = vmul.f32 %v584, 0.01
        %v713 = vmul.f32 %v585, 0.01
        %v714 = vmul.f32 %v586, 0.01
        %v715 = vmul.f32 %v587, 0.01
        %v716 = vmul.f32 %v588, 0.01
        %v717 = vmul.f32 %v589, 0.01
        %v718 = vmul.f32 %v590, 0.01
        %v719 = vmul.f32 %v591, 0.01
        %v720 = vmul.f32 %v592, 0.01
        %v721 = vmul.f32 %v593, 0.01
        %v722 = vmul.f32 %v594, 0.01
        %v723 = vmul.f32 %v595, 0.01
        %v724 = vmul.f32 %v596, 0.01
        %v725 = vmul.f32 %v597, 0.01
        %v726 = vmul.f32 %v598, 0.01
        %v727 = vmul.f32 %v599, 0.01
        %v728 = vmul.f32 %v600, 0.01
        %v729 = vmul.f32 %v601, 0.01
        %v730 = vmul.f32 %v602, 0.01
        %v731 = vmul.f32 %v603, 0.01
        %v732 = vmul.f32 %v604, 0.01
        %v733 = vmul.f32 %v605, 0.01
        %v734 = vmul.f32 %v606, 0.01
        %v735 = vmul.f32 %v607, 0.01
        %v736 = vmul.f32 %v608, 0.01
        %v737 = vmul.f32 %v609, 0.01
        %v738 = vmul.f32 %v610, 0.01
        %v739 = vmul.f32 %v611, 0.01
        %v740 = vmul.f32 %v612, 0.01
        %v741 = vmul.f32 %v613, 0.01
        %v742 = vmul.f32 %v614, 0.01
        %v743 = vmul.f32 %v615, 0.01
        %v744 = vmul.f32 %v616, 0.01
        %v745 = vmul.f32 %v617, 0.01
        %v746 = vmul.f32 %v618, 0.01
        %v747 = vmul.f32 %v619, 0.01
        %v748 = vmul.f32 %v620, 0.01
        %v749 = vmul.f32 %v621, 0.01
        %v750 = vmul.f32 %v622, 0.01
        %v751 = vmul.f32 %v623, 0.01
        %v752 = vmul.f32 %v624, 0.01
        %v753 = vmul.f32 %v625, 0.01
        %v754 = vmul.f32 %v626, 0.01
        %v755 = vmul.f32 %v627, 0.01
        %v756 = vmul.f32 %v628, 0.01
        %v757 = vmul.f32 %v629, 0.01
        %v758 = vmul.f32 %v630, 0.01
        %v759 = vmul.f32 %v631, 0.01
        %v760 = vmul.f32 %v632, 0.01
        %v761 = vmul.f32 %v633, 0.01
        %v762 = vmul.f32 %v634, 0.01
        %v763 = vmul.f32 %v635, 0.01
        %v764 = vmul.f32 %v636, 0.01
        %v765 = vmul.f32 %v637, 0.01
        %v766 = vmul.f32 %v638, 0.01
        %v767 = vsel %vm639, %v575, %v703
        %v768 = vsel %vm640, %v576, %v704
        %v769 = vsel %vm641, %v577, %v705
        %v770 = vsel %vm642, %v578, %v706
        %v771 = vsel %vm643, %v579, %v707
        %v772 = vsel %vm644, %v580, %v708
        %v773 = vsel %vm645, %v581, %v709
        %v774 = vsel %vm646, %v582, %v710
        %v775 = vsel %vm647, %v583, %v711
        %v776 = vsel %vm648, %v584, %v712
        %v777 = vsel %vm649, %v585, %v713
        %v778 = vsel %vm650, %v586, %v714
        %v779 = vsel %vm651, %v587, %v715
        %v780 = vsel %vm652, %v588, %v716
        %v781 = vsel %vm653, %v589, %v717
        %v782 = vsel %vm654, %v590, %v718
        %v783 = vsel %vm655, %v591, %v719
        %v784 = vsel %vm656, %v592, %v720
        %v785 = vsel %vm657, %v593, %v721
        %v786 = vsel %vm658, %v594, %v722
        %v787 = vsel %vm659, %v595, %v723
        %v788 = vsel %vm660, %v596, %v724
        %v789 = vsel %vm661, %v597, %v725
        %v790 = vsel %vm662, %v598, %v726
        %v791 = vsel %vm663, %v599, %v727
        %v792 = vsel %vm664, %v600, %v728
        %v793 = vsel %vm665, %v601, %v729
        %v794 = vsel %vm666, %v602, %v730
        %v795 = vsel %vm667, %v603, %v731
        %v796 = vsel %vm668, %v604, %v732
        %v797 = vsel %vm669, %v605, %v733
        %v798 = vsel %vm670, %v606, %v734
        %v799 = vsel %vm671, %v607, %v735
        %v800 = vsel %vm672, %v608, %v736
        %v801 = vsel %vm673, %v609, %v737
        %v802 = vsel %vm674, %v610, %v738
        %v803 = vsel %vm675, %v611, %v739
        %v804 = vsel %vm676, %v612, %v740
        %v805 = vsel %vm677, %v613, %v741
        %v806 = vsel %vm678, %v614, %v742
        %v807 = vsel %vm679, %v615, %v743
        %v808 = vsel %vm680, %v616, %v744
        %v809 = vsel %vm681, %v617, %v745
        %v810 = vsel %vm682, %v618, %v746
        %v811 = vsel %vm683, %v619, %v747
        %v812 = vsel %vm684, %v620, %v748
        %v813 = vsel %vm685, %v621, %v749
        %v814 = vsel %vm686, %v622, %v750
        %v815 = vsel %vm687, %v623, %v751
        %v816 = vsel %vm688, %v624, %v752
        %v817 = vsel %vm689, %v625, %v753
        %v818 = vsel %vm690, %v626, %v754
        %v819 = vsel %vm691, %v627, %v755
        %v820 = vsel %vm692, %v628, %v756
        %v821 = vsel %vm693, %v629, %v757
        %v822 = vsel %vm694, %v630, %v758
        %v823 = vsel %vm695, %v631, %v759
        %v824 = vsel %vm696, %v632, %v760
        %v825 = vsel %vm697, %v633, %v761
        %v826 = vsel %vm698, %v634, %v762
        %v827 = vsel %vm699, %v635, %v763
        %v828 = vsel %vm700, %v636, %v764
        %v829 = vsel %vm701, %v637, %v765
        %v830 = vsel %vm702, %v638, %v766
        %v831 = vld [vmem:[%s3] sm:$0xff]
        %v832 = vld [vmem:[%s3 + $0x8] sm:$0xff]
        %v833 = vld [vmem:[%s3 + $0x10] sm:$0xff]
        %v834 = vld [vmem:[%s3 + $0x18] sm:$0xff]
        %v835 = vld [vmem:[%s3 + $0x20] sm:$0xff]
        %v836 = vld [vmem:[%s3 + $0x28] sm:$0xff]
        %v837 = vld [vmem:[%s3 + $0x30] sm:$0xff]
        %v838 = vld [vmem:[%s3 + $0x38] sm:$0xff]
        %v839 = vld [vmem:[%s3 + $0x40] sm:$0xff]
        %v840 = vld [vmem:[%s3 + $0x48] sm:$0xff]
        %v841 = vld [vmem:[%s3 + $0x50] sm:$0xff]
        %v842 = vld [vmem:[%s3 + $0x58] sm:$0xff]
        %v843 = vld [vmem:[%s3 + $0x60] sm:$0xff]
        %v844 = vld [vmem:[%s3 + $0x68] sm:$0xff]
        %v845 = vld [vmem:[%s3 + $0x70] sm:$0xff]
        %v846 = vld [vmem:[%s3 + $0x78] sm:$0xff]
        %847 = vmatprep.subr.mxu0 %v768
        %848 = vmatpush1.msra.mxu0 %v767
        %849 = vmatprep.subr.mxu0 %v772
        %850 = vmatpush1.msra.mxu0 %v771
        %851 = vmatprep.subr.mxu0 %v776
        %852 = vmatpush1.msra.mxu0 %v775
        %853 = vmatprep.subr.mxu0 %v780
        %854 = vmatpush1.msra.mxu0 %v779
        %855 = vmatprep.subr.mxu0 %v784
        %856 = vmatpush1.msra.mxu0 %v783
        %857 = vmatprep.subr.mxu0 %v788
        %858 = vmatpush1.msra.mxu0 %v787
        %859 = vmatprep.subr.mxu0 %v792
        %860 = vmatpush1.msra.mxu0 %v791
        %861 = vmatprep.subr.mxu0 %v796
        %862 = vmatpush1.msra.mxu0 %v795
        %863 = vmatprep.subr.mxu0 %v800
        %864 = vmatpush1.msra.mxu0 %v799
        %865 = vmatprep.subr.mxu0 %v804
        %866 = vmatpush1.msra.mxu0 %v803
        %867 = vmatprep.subr.mxu0 %v808
        %868 = vmatpush1.msra.mxu0 %v807
        %869 = vmatprep.subr.mxu0 %v812
        %870 = vmatpush1.msra.mxu0 %v811
        %871 = vmatprep.subr.mxu0 %v816
        %872 = vmatpush1.msra.mxu0 %v815
        %873 = vmatprep.subr.mxu0 %v820
        %874 = vmatpush1.msra.mxu0 %v819
        %875 = vmatprep.subr.mxu0 %v824
        %876 = vmatpush1.msra.mxu0 %v823
        %877 = vmatprep.subr.mxu0 %v828
        %878 = vmatpush1.msra.mxu0 %v827
        %879 = vmatprep.subr.mxu0 0.0
        %880 = vmatpush1.msra.mxu0 0.0
        %881 = vmatprep.subr.mxu0 0.0
        %882 = vmatpush1.msra.mxu0 0.0
        %883 = vmatprep.subr.mxu0 0.0
        %884 = vmatpush1.msra.mxu0 0.0
        %885 = vmatprep.subr.mxu0 0.0
        %886 = vmatpush1.msra.mxu0 0.0
        %887 = vmatprep.subr.mxu0 0.0
        %888 = vmatpush1.msra.mxu0 0.0
        %889 = vmatprep.subr.mxu0 0.0
        %890 = vmatpush1.msra.mxu0 0.0
        %891 = vmatprep.subr.mxu0 0.0
        %892 = vmatpush1.msra.mxu0 0.0
        %893 = vmatprep.subr.mxu0 0.0
        %894 = vmatpush1.msra.mxu0 0.0
        %895 = vmatprep.subr.mxu0 0.0
        %896 = vmatpush1.msra.mxu0 0.0
        %897 = vmatprep.subr.mxu0 0.0
        %898 = vmatpush1.msra.mxu0 0.0
        %899 = vmatprep.subr.mxu0 0.0
        %900 = vmatpush1.msra.mxu0 0.0
        %901 = vmatprep.subr.mxu0 0.0
        %902 = vmatpush1.msra.mxu0 0.0
        %903 = vmatprep.subr.mxu0 0.0
        %904 = vmatpush1.msra.mxu0 0.0
        %905 = vmatprep.subr.mxu0 0.0
        %906 = vmatpush1.msra.mxu0 0.0
        %907 = vmatprep.subr.mxu0 0.0
        %908 = vmatpush1.msra.mxu0 0.0
        %909 = vmatprep.subr.mxu0 0.0
        %910 = vmatpush1.msra.mxu0 0.0
        %911 = vmatprep.mubr.f32.mxu0 0.0
        %912 = vmatmul.mubr.f32.gmra.mrb[0].mxu0 %v831
        %v913 = vpop.f32.mrb[0].mxu0
        %v914 = vadd.f32 0.0, %v913
        %v915 = vpop.f32.mrb[0].mxu0
        %v916 = vadd.f32 0.0, %v915
        %917 = vmatprep.mubr.f32.mxu0 0.0
        %918 = vmatmul.mubr.f32.gmra.mrb[0].mxu0 %v832
        %v919 = vpop.f32.mrb[0].mxu0
        %v920 = vadd.f32 0.0, %v919
        %v921 = vpop.f32.mrb[0].mxu0
        %v922 = vadd.f32 0.0, %v921
        %923 = vmatprep.mubr.f32.mxu0 0.0
        %924 = vmatmul.mubr.f32.gmra.mrb[0].mxu0 %v833
        %v925 = vpop.f32.mrb[0].mxu0
        %v926 = vadd.f32 0.0, %v925
        %v927 = vpop.f32.mrb[0].mxu0
        %v928 = vadd.f32 0.0, %v927
        %929 = vmatprep.mubr.f32.mxu0 0.0
        %930 = vmatmul.mubr.f32.gmra.mrb[0].mxu0 %v834
        %v931 = vpop.f32.mrb[0].mxu0
        %v932 = vadd.f32 0.0, %v931
        %v933 = vpop.f32.mrb[0].mxu0
        %v934 = vadd.f32 0.0, %v933
        %935 = vmatprep.mubr.f32.mxu0 0.0
        %936 = vmatmul.mubr.f32.gmra.mrb[0].mxu0 %v835
        %v937 = vpop.f32.mrb[0].mxu0
        %v938 = vadd.f32 0.0, %v937
        %v939 = vpop.f32.mrb[0].mxu0
        %v940 = vadd.f32 0.0, %v939
        %941 = vmatprep.mubr.f32.mxu0 0.0
        %942 = vmatmul.mubr.f32.gmra.mrb[0].mxu0 %v836
        %v943 = vpop.f32.mrb[0].mxu0
        %v944 = vadd.f32 0.0, %v943
        %v945 = vpop.f32.mrb[0].mxu0
        %v946 = vadd.f32 0.0, %v945
        %947 = vmatprep.mubr.f32.mxu0 0.0
        %948 = vmatmul.mubr.f32.gmra.mrb[0].mxu0 %v837
        %v949 = vpop.f32.mrb[0].mxu0
        %v950 = vadd.f32 0.0, %v949
        %v951 = vpop.f32.mrb[0].mxu0
        %v952 = vadd.f32 0.0, %v951
        %953 = vmatprep.mubr.f32.mxu0 0.0
        %954 = vmatmul.mubr.f32.gmra.mrb[0].mxu0 %v838
        %v955 = vpop.f32.mrb[0].mxu0
        %v956 = vadd.f32 0.0, %v955
        %v957 = vpop.f32.mrb[0].mxu0
        %v958 = vadd.f32 0.0, %v957
        %959 = vmatprep.mubr.f32.mxu0 0.0
        %960 = vmatmul.mubr.f32.gmra.mrb[0].mxu0 %v839
        %v961 = vpop.f32.mrb[0].mxu0
        %v962 = vadd.f32 0.0, %v961
        %v963 = vpop.f32.mrb[0].mxu0
        %v964 = vadd.f32 0.0, %v963
        %965 = vmatprep.mubr.f32.mxu0 0.0
        %966 = vmatmul.mubr.f32.gmra.mrb[0].mxu0 %v840
        %v967 = vpop.f32.mrb[0].mxu0
        %v968 = vadd.f32 0.0, %v967
        %v969 = vpop.f32.mrb[0].mxu0
        %v970 = vadd.f32 0.0, %v969
        %971 = vmatprep.mubr.f32.mxu0 0.0
        %972 = vmatmul.mubr.f32.gmra.mrb[0].mxu0 %v841
        %v973 = vpop.f32.mrb[0].mxu0
        %v974 = vadd.f32 0.0, %v973
        %v975 = vpop.f32.mrb[0].mxu0
        %v976 = vadd.f32 0.0, %v975
        %977 = vmatprep.mubr.f32.mxu0 0.0
        %978 = vmatmul.mubr.f32.gmra.mrb[0].mxu0 %v842
        %v979 = vpop.f32.mrb[0].mxu0
        %v980 = vadd.f32 0.0, %v979
        %v981 = vpop.f32.mrb[0].mxu0
        %v982 = vadd.f32 0.0, %v981
        %983 = vmatprep.mubr.f32.mxu0 0.0
        %984 = vmatmul.mubr.f32.gmra.mrb[0].mxu0 %v843
        %v985 = vpop.f32.mrb[0].mxu0
        %v986 = vadd.f32 0.0, %v985
        %v987 = vpop.f32.mrb[0].mxu0
        %v988 = vadd.f32 0.0, %v987
        %989 = vmatprep.mubr.f32.mxu0 0.0
        %990 = vmatmul.mubr.f32.gmra.mrb[0].mxu0 %v844
        %v991 = vpop.f32.mrb[0].mxu0
        %v992 = vadd.f32 0.0, %v991
        %v993 = vpop.f32.mrb[0].mxu0
        %v994 = vadd.f32 0.0, %v993
        %995 = vmatprep.mubr.f32.mxu0 0.0
        %996 = vmatmul.mubr.f32.gmra.mrb[0].mxu0 %v845
        %v997 = vpop.f32.mrb[0].mxu0
        %v998 = vadd.f32 0.0, %v997
        %v999 = vpop.f32.mrb[0].mxu0
        %v1000 = vadd.f32 0.0, %v999
        %1001 = vmatprep.mubr.f32.mxu0 0.0
        %1002 = vmatmul.mubr.f32.gmra.mrb[0].mxu0 %v846
        %v1003 = vpop.f32.mrb[0].mxu0
        %v1004 = vadd.f32 0.0, %v1003
        %v1005 = vpop.f32.mrb[0].mxu0
        %v1006 = vadd.f32 0.0, %v1005
        %1007 = vdwg.mxu0
        %1008 = vmatprep.subr.mxu0 %v770
        %1009 = vmatpush1.msra.mxu0 %v769
        %1010 = vmatprep.subr.mxu0 %v774
        %1011 = vmatpush1.msra.mxu0 %v773
        %1012 = vmatprep.subr.mxu0 %v778
        %1013 = vmatpush1.msra.mxu0 %v777
        %1014 = vmatprep.subr.mxu0 %v782
        %1015 = vmatpush1.msra.mxu0 %v781
        %1016 = vmatprep.subr.mxu0 %v786
        %1017 = vmatpush1.msra.mxu0 %v785
        %1018 = vmatprep.subr.mxu0 %v790
        %1019 = vmatpush1.msra.mxu0 %v789
        %1020 = vmatprep.subr.mxu0 %v794
        %1021 = vmatpush1.msra.mxu0 %v793
        %1022 = vmatprep.subr.mxu0 %v798
        %1023 = vmatpush1.msra.mxu0 %v797
        %1024 = vmatprep.subr.mxu0 %v802
        %1025 = vmatpush1.msra.mxu0 %v801
        %1026 = vmatprep.subr.mxu0 %v806
        %1027 = vmatpush1.msra.mxu0 %v805
        %1028 = vmatprep.subr.mxu0 %v810
        %1029 = vmatpush1.msra.mxu0 %v809
        %1030 = vmatprep.subr.mxu0 %v814
        %1031 = vmatpush1.msra.mxu0 %v813
        %1032 = vmatprep.subr.mxu0 %v818
        %1033 = vmatpush1.msra.mxu0 %v817
        %1034 = vmatprep.subr.mxu0 %v822
        %1035 = vmatpush1.msra.mxu0 %v821
        %1036 = vmatprep.subr.mxu0 %v826
        %1037 = vmatpush1.msra.mxu0 %v825
        %1038 = vmatprep.subr.mxu0 %v830
        %1039 = vmatpush1.msra.mxu0 %v829
        %1040 = vmatprep.subr.mxu0 0.0
        %1041 = vmatpush1.msra.mxu0 0.0
        %1042 = vmatprep.subr.mxu0 0.0
        %1043 = vmatpush1.msra.mxu0 0.0
        %1044 = vmatprep.subr.mxu0 0.0
        %1045 = vmatpush1.msra.mxu0 0.0
        %1046 = vmatprep.subr.mxu0 0.0
        %1047 = vmatpush1.msra.mxu0 0.0
        %1048 = vmatprep.subr.mxu0 0.0
        %1049 = vmatpush1.msra.mxu0 0.0
        %1050 = vmatprep.subr.mxu0 0.0
        %1051 = vmatpush1.msra.mxu0 0.0
        %1052 = vmatprep.subr.mxu0 0.0
        %1053 = vmatpush1.msra.mxu0 0.0
        %1054 = vmatprep.subr.mxu0 0.0
        %1055 = vmatpush1.msra.mxu0 0.0
        %1056 = vmatprep.subr.mxu0 0.0
        %1057 = vmatpush1.msra.mxu0 0.0
        %1058 = vmatprep.subr.mxu0 0.0
        %1059 = vmatpush1.msra.mxu0 0.0
        %1060 = vmatprep.subr.mxu0 0.0
        %1061 = vmatpush1.msra.mxu0 0.0
        %1062 = vmatprep.subr.mxu0 0.0
        %1063 = vmatpush1.msra.mxu0 0.0
        %1064 = vmatprep.subr.mxu0 0.0
        %1065 = vmatpush1.msra.mxu0 0.0
        %1066 = vmatprep.subr.mxu0 0.0
        %1067 = vmatpush1.msra.mxu0 0.0
        %1068 = vmatprep.subr.mxu0 0.0
        %1069 = vmatpush1.msra.mxu0 0.0
        %1070 = vmatprep.subr.mxu0 0.0
        %1071 = vmatpush1.msra.mxu0 0.0
        %1072 = vmatprep.mubr.f32.mxu0 0.0
        %1073 = vmatmul.mubr.f32.gmra.mrb[0].mxu0 %v831
        %v1074 = vpop.f32.mrb[0].mxu0
        %v1075 = vadd.f32 0.0, %v1074
        %v1076 = vpop.f32.mrb[0].mxu0
        %v1077 = vadd.f32 0.0, %v1076
        %1078 = vmatprep.mubr.f32.mxu0 0.0
        %1079 = vmatmul.mubr.f32.gmra.mrb[0].mxu0 %v832
        %v1080 = vpop.f32.mrb[0].mxu0
        %v1081 = vadd.f32 0.0, %v1080
        %v1082 = vpop.f32.mrb[0].mxu0
        %v1083 = vadd.f32 0.0, %v1082
        %1084 = vmatprep.mubr.f32.mxu0 0.0
        %1085 = vmatmul.mubr.f32.gmra.mrb[0].mxu0 %v833
        %v1086 = vpop.f32.mrb[0].mxu0
        %v1087 = vadd.f32 0.0, %v1086
        %v1088 = vpop.f32.mrb[0].mxu0
        %v1089 = vadd.f32 0.0, %v1088
        %1090 = vmatprep.mubr.f32.mxu0 0.0
        %1091 = vmatmul.mubr.f32.gmra.mrb[0].mxu0 %v834
        %v1092 = vpop.f32.mrb[0].mxu0
        %v1093 = vadd.f32 0.0, %v1092
        %v1094 = vpop.f32.mrb[0].mxu0
        %v1095 = vadd.f32 0.0, %v1094
        %1096 = vmatprep.mubr.f32.mxu0 0.0
        %1097 = vmatmul.mubr.f32.gmra.mrb[0].mxu0 %v835
        %v1098 = vpop.f32.mrb[0].mxu0
        %v1099 = vadd.f32 0.0, %v1098
        %v1100 = vpop.f32.mrb[0].mxu0
        %v1101 = vadd.f32 0.0, %v1100
        %1102 = vmatprep.mubr.f32.mxu0 0.0
        %1103 = vmatmul.mubr.f32.gmra.mrb[0].mxu0 %v836
        %v1104 = vpop.f32.mrb[0].mxu0
        %v1105 = vadd.f32 0.0, %v1104
        %v1106 = vpop.f32.mrb[0].mxu0
        %v1107 = vadd.f32 0.0, %v1106
        %1108 = vmatprep.mubr.f32.mxu0 0.0
        %1109 = vmatmul.mubr.f32.gmra.mrb[0].mxu0 %v837
        %v1110 = vpop.f32.mrb[0].mxu0
        %v1111 = vadd.f32 0.0, %v1110
        %v1112 = vpop.f32.mrb[0].mxu0
        %v1113 = vadd.f32 0.0, %v1112
        %1114 = vmatprep.mubr.f32.mxu0 0.0
        %1115 = vmatmul.mubr.f32.gmra.mrb[0].mxu0 %v838
        %v1116 = vpop.f32.mrb[0].mxu0
        %v1117 = vadd.f32 0.0, %v1116
        %v1118 = vpop.f32.mrb[0].mxu0
        %v1119 = vadd.f32 0.0, %v1118
        %1120 = vmatprep.mubr.f32.mxu0 0.0
        %1121 = vmatmul.mubr.f32.gmra.mrb[0].mxu0 %v839
        %v1122 = vpop.f32.mrb[0].mxu0
        %v1123 = vadd.f32 0.0, %v1122
        %v1124 = vpop.f32.mrb[0].mxu0
        %v1125 = vadd.f32 0.0, %v1124
        %1126 = vmatprep.mubr.f32.mxu0 0.0
        %1127 = vmatmul.mubr.f32.gmra.mrb[0].mxu0 %v840
        %v1128 = vpop.f32.mrb[0].mxu0
        %v1129 = vadd.f32 0.0, %v1128
        %v1130 = vpop.f32.mrb[0].mxu0
        %v1131 = vadd.f32 0.0, %v1130
        %1132 = vmatprep.mubr.f32.mxu0 0.0
        %1133 = vmatmul.mubr.f32.gmra.mrb[0].mxu0 %v841
        %v1134 = vpop.f32.mrb[0].mxu0
        %v1135 = vadd.f32 0.0, %v1134
        %v1136 = vpop.f32.mrb[0].mxu0
        %v1137 = vadd.f32 0.0, %v1136
        %1138 = vmatprep.mubr.f32.mxu0 0.0
        %1139 = vmatmul.mubr.f32.gmra.mrb[0].mxu0 %v842
        %v1140 = vpop.f32.mrb[0].mxu0
        %v1141 = vadd.f32 0.0, %v1140
        %v1142 = vpop.f32.mrb[0].mxu0
        %v1143 = vadd.f32 0.0, %v1142
        %1144 = vmatprep.mubr.f32.mxu0 0.0
        %1145 = vmatmul.mubr.f32.gmra.mrb[0].mxu0 %v843
        %v1146 = vpop.f32.mrb[0].mxu0
        %v1147 = vadd.f32 0.0, %v1146
        %v1148 = vpop.f32.mrb[0].mxu0
        %v1149 = vadd.f32 0.0, %v1148
        %1150 = vmatprep.mubr.f32.mxu0 0.0
        %1151 = vmatmul.mubr.f32.gmra.mrb[0].mxu0 %v844
        %v1152 = vpop.f32.mrb[0].mxu0
        %v1153 = vadd.f32 0.0, %v1152
        %v1154 = vpop.f32.mrb[0].mxu0
        %v1155 = vadd.f32 0.0, %v1154
        %1156 = vmatprep.mubr.f32.mxu0 0.0
        %1157 = vmatmul.mubr.f32.gmra.mrb[0].mxu0 %v845
        %v1158 = vpop.f32.mrb[0].mxu0
        %v1159 = vadd.f32 0.0, %v1158
        %v1160 = vpop.f32.mrb[0].mxu0
        %v1161 = vadd.f32 0.0, %v1160
        %1162 = vmatprep.mubr.f32.mxu0 0.0
        %1163 = vmatmul.mubr.f32.gmra.mrb[0].mxu0 %v846
        %v1164 = vpop.f32.mrb[0].mxu0
        %v1165 = vadd.f32 0.0, %v1164
        %v1166 = vpop.f32.mrb[0].mxu0
        %v1167 = vadd.f32 0.0, %v1166
        %1168 = vdwg.mxu0
        %vm1169 = vcmp.gt.f32.partialorder %v914, 0.0
        %vm1170 = vcmp.gt.f32.partialorder %v916, 0.0
        %vm1171 = vcmp.gt.f32.partialorder %v1075, 0.0
        %vm1172 = vcmp.gt.f32.partialorder %v1077, 0.0
        %vm1173 = vcmp.gt.f32.partialorder %v920, 0.0
        %vm1174 = vcmp.gt.f32.partialorder %v922, 0.0
        %vm1175 = vcmp.gt.f32.partialorder %v1081, 0.0
        %vm1176 = vcmp.gt.f32.partialorder %v1083, 0.0
        %vm1177 = vcmp.gt.f32.partialorder %v926, 0.0
        %vm1178 = vcmp.gt.f32.partialorder %v928, 0.0
        %vm1179 = vcmp.gt.f32.partialorder %v1087, 0.0
        %vm1180 = vcmp.gt.f32.partialorder %v1089, 0.0
        %vm1181 = vcmp.gt.f32.partialorder %v932, 0.0
        %vm1182 = vcmp.gt.f32.partialorder %v934, 0.0
        %vm1183 = vcmp.gt.f32.partialorder %v1093, 0.0
        %vm1184 = vcmp.gt.f32.partialorder %v1095, 0.0
        %vm1185 = vcmp.gt.f32.partialorder %v938, 0.0
        %vm1186 = vcmp.gt.f32.partialorder %v940, 0.0
        %vm1187 = vcmp.gt.f32.partialorder %v1099, 0.0
        %vm1188 = vcmp.gt.f32.partialorder %v1101, 0.0
        %vm1189 = vcmp.gt.f32.partialorder %v944, 0.0
        %vm1190 = vcmp.gt.f32.partialorder %v946, 0.0
        %vm1191 = vcmp.gt.f32.partialorder %v1105, 0.0
        %vm1192 = vcmp.gt.f32.partialorder %v1107, 0.0
        %vm1193 = vcmp.gt.f32.partialorder %v950, 0.0
        %vm1194 = vcmp.gt.f32.partialorder %v952, 0.0
        %vm1195 = vcmp.gt.f32.partialorder %v1111, 0.0
        %vm1196 = vcmp.gt.f32.partialorder %v1113, 0.0
        %vm1197 = vcmp.gt.f32.partialorder %v956, 0.0
        %vm1198 = vcmp.gt.f32.partialorder %v958, 0.0
        %vm1199 = vcmp.gt.f32.partialorder %v1117, 0.0
        %vm1200 = vcmp.gt.f32.partialorder %v1119, 0.0
        %vm1201 = vcmp.gt.f32.partialorder %v962, 0.0
        %vm1202 = vcmp.gt.f32.partialorder %v964, 0.0
        %vm1203 = vcmp.gt.f32.partialorder %v1123, 0.0
        %vm1204 = vcmp.gt.f32.partialorder %v1125, 0.0
        %vm1205 = vcmp.gt.f32.partialorder %v968, 0.0
        %vm1206 = vcmp.gt.f32.partialorder %v970, 0.0
        %vm1207 = vcmp.gt.f32.partialorder %v1129, 0.0
        %vm1208 = vcmp.gt.f32.partialorder %v1131, 0.0
        %vm1209 = vcmp.gt.f32.partialorder %v974, 0.0
        %vm1210 = vcmp.gt.f32.partialorder %v976, 0.0
        %vm1211 = vcmp.gt.f32.partialorder %v1135, 0.0
        %vm1212 = vcmp.gt.f32.partialorder %v1137, 0.0
        %vm1213 = vcmp.gt.f32.partialorder %v980, 0.0
        %vm1214 = vcmp.gt.f32.partialorder %v982, 0.0
        %vm1215 = vcmp.gt.f32.partialorder %v1141, 0.0
        %vm1216 = vcmp.gt.f32.partialorder %v1143, 0.0
        %vm1217 = vcmp.gt.f32.partialorder %v986, 0.0
        %vm1218 = vcmp.gt.f32.partialorder %v988, 0.0
        %vm1219 = vcmp.gt.f32.partialorder %v1147, 0.0
        %vm1220 = vcmp.gt.f32.partialorder %v1149, 0.0
        %vm1221 = vcmp.gt.f32.partialorder %v992, 0.0
        %vm1222 = vcmp.gt.f32.partialorder %v994, 0.0
        %vm1223 = vcmp.gt.f32.partialorder %v1153, 0.0
        %vm1224 = vcmp.gt.f32.partialorder %v1155, 0.0
        %vm1225 = vcmp.gt.f32.partialorder %v998, 0.0
        %vm1226 = vcmp.gt.f32.partialorder %v1000, 0.0
        %vm1227 = vcmp.gt.f32.partialorder %v1159, 0.0
        %vm1228 = vcmp.gt.f32.partialorder %v1161, 0.0
        %vm1229 = vcmp.gt.f32.partialorder %v1004, 0.0
        %vm1230 = vcmp.gt.f32.partialorder %v1006, 0.0
        %vm1231 = vcmp.gt.f32.partialorder %v1165, 0.0
        %vm1232 = vcmp.gt.f32.partialorder %v1167, 0.0
        %v1233 = vmul.f32 %v914, 0.01
        %v1234 = vmul.f32 %v916, 0.01
        %v1235 = vmul.f32 %v1075, 0.01
        %v1236 = vmul.f32 %v1077, 0.01
        %v1237 = vmul.f32 %v920, 0.01
        %v1238 = vmul.f32 %v922, 0.01
        %v1239 = vmul.f32 %v1081, 0.01
        %v1240 = vmul.f32 %v1083, 0.01
        %v1241 = vmul.f32 %v926, 0.01
        %v1242 = vmul.f32 %v928, 0.01
        %v1243 = vmul.f32 %v1087, 0.01
        %v1244 = vmul.f32 %v1089, 0.01
        %v1245 = vmul.f32 %v932, 0.01
        %v1246 = vmul.f32 %v934, 0.01
        %v1247 = vmul.f32 %v1093, 0.01
        %v1248 = vmul.f32 %v1095, 0.01
        %v1249 = vmul.f32 %v938, 0.01
        %v1250 = vmul.f32 %v940, 0.01
        %v1251 = vmul.f32 %v1099, 0.01
        %v1252 = vmul.f32 %v1101, 0.01
        %v1253 = vmul.f32 %v944, 0.01
        %v1254 = vmul.f32 %v946, 0.01
        %v1255 = vmul.f32 %v1105, 0.01
        %v1256 = vmul.f32 %v1107, 0.01
        %v1257 = vmul.f32 %v950, 0.01
        %v1258 = vmul.f32 %v952, 0.01
        %v1259 = vmul.f32 %v1111, 0.01
        %v1260 = vmul.f32 %v1113, 0.01
        %v1261 = vmul.f32 %v956, 0.01
        %v1262 = vmul.f32 %v958, 0.01
        %v1263 = vmul.f32 %v1117, 0.01
        %v1264 = vmul.f32 %v1119, 0.01
        %v1265 = vmul.f32 %v962, 0.01
        %v1266 = vmul.f32 %v964, 0.01
        %v1267 = vmul.f32 %v1123, 0.01
        %v1268 = vmul.f32 %v1125, 0.01
        %v1269 = vmul.f32 %v968, 0.01
        %v1270 = vmul.f32 %v970, 0.01
        %v1271 = vmul.f32 %v1129, 0.01
        %v1272 = vmul.f32 %v1131, 0.01
        %v1273 = vmul.f32 %v974, 0.01
        %v1274 = vmul.f32 %v976, 0.01
        %v1275 = vmul.f32 %v1135, 0.01
        %v1276 = vmul.f32 %v1137, 0.01
        %v1277 = vmul.f32 %v980, 0.01
        %v1278 = vmul.f32 %v982, 0.01
        %v1279 = vmul.f32 %v1141, 0.01
        %v1280 = vmul.f32 %v1143, 0.01
        %v1281 = vmul.f32 %v986, 0.01
        %v1282 = vmul.f32 %v988, 0.01
        %v1283 = vmul.f32 %v1147, 0.01
        %v1284 = vmul.f32 %v1149, 0.01
        %v1285 = vmul.f32 %v992, 0.01
        %v1286 = vmul.f32 %v994, 0.01
        %v1287 = vmul.f32 %v1153, 0.01
        %v1288 = vmul.f32 %v1155, 0.01
        %v1289 = vmul.f32 %v998, 0.01
        %v1290 = vmul.f32 %v1000, 0.01
        %v1291 = vmul.f32 %v1159, 0.01
        %v1292 = vmul.f32 %v1161, 0.01
        %v1293 = vmul.f32 %v1004, 0.01
        %v1294 = vmul.f32 %v1006, 0.01
        %v1295 = vmul.f32 %v1165, 0.01
        %v1296 = vmul.f32 %v1167, 0.01
        %v1297 = vsel %vm1169, %v914, %v1233
        %v1298 = vsel %vm1170, %v916, %v1234
        %v1299 = vsel %vm1171, %v1075, %v1235
        %v1300 = vsel %vm1172, %v1077, %v1236
        %v1301 = vsel %vm1173, %v920, %v1237
        %v1302 = vsel %vm1174, %v922, %v1238
        %v1303 = vsel %vm1175, %v1081, %v1239
        %v1304 = vsel %vm1176, %v1083, %v1240
        %v1305 = vsel %vm1177, %v926, %v1241
        %v1306 = vsel %vm1178, %v928, %v1242
        %v1307 = vsel %vm1179, %v1087, %v1243
        %v1308 = vsel %vm1180, %v1089, %v1244
        %v1309 = vsel %vm1181, %v932, %v1245
        %v1310 = vsel %vm1182, %v934, %v1246
        %v1311 = vsel %vm1183, %v1093, %v1247
        %v1312 = vsel %vm1184, %v1095, %v1248
        %v1313 = vsel %vm1185, %v938, %v1249
        %v1314 = vsel %vm1186, %v940, %v1250
        %v1315 = vsel %vm1187, %v1099, %v1251
        %v1316 = vsel %vm1188, %v1101, %v1252
        %v1317 = vsel %vm1189, %v944, %v1253
        %v1318 = vsel %vm1190, %v946, %v1254
        %v1319 = vsel %vm1191, %v1105, %v1255
        %v1320 = vsel %vm1192, %v1107, %v1256
        %v1321 = vsel %vm1193, %v950, %v1257
        %v1322 = vsel %vm1194, %v952, %v1258
        %v1323 = vsel %vm1195, %v1111, %v1259
        %v1324 = vsel %vm1196, %v1113, %v1260
        %v1325 = vsel %vm1197, %v956, %v1261
        %v1326 = vsel %vm1198, %v958, %v1262
        %v1327 = vsel %vm1199, %v1117, %v1263
        %v1328 = vsel %vm1200, %v1119, %v1264
        %v1329 = vsel %vm1201, %v962, %v1265
        %v1330 = vsel %vm1202, %v964, %v1266
        %v1331 = vsel %vm1203, %v1123, %v1267
        %v1332 = vsel %vm1204, %v1125, %v1268
        %v1333 = vsel %vm1205, %v968, %v1269
        %v1334 = vsel %vm1206, %v970, %v1270
        %v1335 = vsel %vm1207, %v1129, %v1271
        %v1336 = vsel %vm1208, %v1131, %v1272
        %v1337 = vsel %vm1209, %v974, %v1273
        %v1338 = vsel %vm1210, %v976, %v1274
        %v1339 = vsel %vm1211, %v1135, %v1275
        %v1340 = vsel %vm1212, %v1137, %v1276
        %v1341 = vsel %vm1213, %v980, %v1277
        %v1342 = vsel %vm1214, %v982, %v1278
        %v1343 = vsel %vm1215, %v1141, %v1279
        %v1344 = vsel %vm1216, %v1143, %v1280
        %v1345 = vsel %vm1217, %v986, %v1281
        %v1346 = vsel %vm1218, %v988, %v1282
        %v1347 = vsel %vm1219, %v1147, %v1283
        %v1348 = vsel %vm1220, %v1149, %v1284
        %v1349 = vsel %vm1221, %v992, %v1285
        %v1350 = vsel %vm1222, %v994, %v1286
        %v1351 = vsel %vm1223, %v1153, %v1287
        %v1352 = vsel %vm1224, %v1155, %v1288
        %v1353 = vsel %vm1225, %v998, %v1289
        %v1354 = vsel %vm1226, %v1000, %v1290
        %v1355 = vsel %vm1227, %v1159, %v1291
        %v1356 = vsel %vm1228, %v1161, %v1292
        %v1357 = vsel %vm1229, %v1004, %v1293
        %v1358 = vsel %vm1230, %v1006, %v1294
        %v1359 = vsel %vm1231, %v1165, %v1295
        %v1360 = vsel %vm1232, %v1167, %v1296
        %v1361 = vld [vmem:[%s4] sm:$0xff]
        %v1362 = vld [vmem:[%s4 + $0x8] sm:$0xff]
        %v1363 = vld [vmem:[%s4 + $0x10] sm:$0xff]
        %v1364 = vld [vmem:[%s4 + $0x18] sm:$0xff]
        %v1365 = vld [vmem:[%s4 + $0x20] sm:$0xff]
        %v1366 = vld [vmem:[%s4 + $0x28] sm:$0xff]
        %v1367 = vld [vmem:[%s4 + $0x30] sm:$0xff]
        %v1368 = vld [vmem:[%s4 + $0x38] sm:$0xff]
        %v1369 = vld [vmem:[%s4 + $0x40] sm:$0xff]
        %v1370 = vld [vmem:[%s4 + $0x48] sm:$0xff]
        %v1371 = vld [vmem:[%s4 + $0x50] sm:$0xff]
        %v1372 = vld [vmem:[%s4 + $0x58] sm:$0xff]
        %v1373 = vld [vmem:[%s4 + $0x60] sm:$0xff]
        %v1374 = vld [vmem:[%s4 + $0x68] sm:$0xff]
        %v1375 = vld [vmem:[%s4 + $0x70] sm:$0xff]
        %v1376 = vld [vmem:[%s4 + $0x78] sm:$0xff]
        %1377 = vmatprep.subr.mxu0 %v1298
        %1378 = vmatpush1.msra.mxu0 %v1297
        %1379 = vmatprep.subr.mxu0 %v1302
        %1380 = vmatpush1.msra.mxu0 %v1301
        %1381 = vmatprep.subr.mxu0 %v1306
        %1382 = vmatpush1.msra.mxu0 %v1305
        %1383 = vmatprep.subr.mxu0 %v1310
        %1384 = vmatpush1.msra.mxu0 %v1309
        %1385 = vmatprep.subr.mxu0 %v1314
        %1386 = vmatpush1.msra.mxu0 %v1313
        %1387 = vmatprep.subr.mxu0 %v1318
        %1388 = vmatpush1.msra.mxu0 %v1317
        %1389 = vmatprep.subr.mxu0 %v1322
        %1390 = vmatpush1.msra.mxu0 %v1321
        %1391 = vmatprep.subr.mxu0 %v1326
        %1392 = vmatpush1.msra.mxu0 %v1325
        %1393 = vmatprep.subr.mxu0 %v1330
        %1394 = vmatpush1.msra.mxu0 %v1329
        %1395 = vmatprep.subr.mxu0 %v1334
        %1396 = vmatpush1.msra.mxu0 %v1333
        %1397 = vmatprep.subr.mxu0 %v1338
        %1398 = vmatpush1.msra.mxu0 %v1337
        %1399 = vmatprep.subr.mxu0 %v1342
        %1400 = vmatpush1.msra.mxu0 %v1341
        %1401 = vmatprep.subr.mxu0 %v1346
        %1402 = vmatpush1.msra.mxu0 %v1345
        %1403 = vmatprep.subr.mxu0 %v1350
        %1404 = vmatpush1.msra.mxu0 %v1349
        %1405 = vmatprep.subr.mxu0 %v1354
        %1406 = vmatpush1.msra.mxu0 %v1353
        %1407 = vmatprep.subr.mxu0 %v1358
        %1408 = vmatpush1.msra.mxu0 %v1357
        %1409 = vmatprep.subr.mxu0 0.0
        %1410 = vmatpush1.msra.mxu0 0.0
        %1411 = vmatprep.subr.mxu0 0.0
        %1412 = vmatpush1.msra.mxu0 0.0
        %1413 = vmatprep.subr.mxu0 0.0
        %1414 = vmatpush1.msra.mxu0 0.0
        %1415 = vmatprep.subr.mxu0 0.0
        %1416 = vmatpush1.msra.mxu0 0.0
        %1417 = vmatprep.subr.mxu0 0.0
        %1418 = vmatpush1.msra.mxu0 0.0
        %1419 = vmatprep.subr.mxu0 0.0
        %1420 = vmatpush1.msra.mxu0 0.0
        %1421 = vmatprep.subr.mxu0 0.0
        %1422 = vmatpush1.msra.mxu0 0.0
        %1423 = vmatprep.subr.mxu0 0.0
        %1424 = vmatpush1.msra.mxu0 0.0
        %1425 = vmatprep.subr.mxu0 0.0
        %1426 = vmatpush1.msra.mxu0 0.0
        %1427 = vmatprep.subr.mxu0 0.0
        %1428 = vmatpush1.msra.mxu0 0.0
        %1429 = vmatprep.subr.mxu0 0.0
        %1430 = vmatpush1.msra.mxu0 0.0
        %1431 = vmatprep.subr.mxu0 0.0
        %1432 = vmatpush1.msra.mxu0 0.0
        %1433 = vmatprep.subr.mxu0 0.0
        %1434 = vmatpush1.msra.mxu0 0.0
        %1435 = vmatprep.subr.mxu0 0.0
        %1436 = vmatpush1.msra.mxu0 0.0
        %1437 = vmatprep.subr.mxu0 0.0
        %1438 = vmatpush1.msra.mxu0 0.0
        %1439 = vmatprep.subr.mxu0 0.0
        %1440 = vmatpush1.msra.mxu0 0.0
        %1441 = vmatprep.mubr.f32.mxu0 0.0
        %1442 = vmatmul.mubr.f32.gmra.mrb[0].mxu0 %v1361
        %v1443 = vpop.f32.mrb[0].mxu0
        %v1444 = vadd.f32 0.0, %v1443
        %v1445 = vpop.f32.mrb[0].mxu0
        %v1446 = vadd.f32 0.0, %v1445
        %1447 = vmatprep.mubr.f32.mxu0 0.0
        %1448 = vmatmul.mubr.f32.gmra.mrb[0].mxu0 %v1362
        %v1449 = vpop.f32.mrb[0].mxu0
        %v1450 = vadd.f32 0.0, %v1449
        %v1451 = vpop.f32.mrb[0].mxu0
        %v1452 = vadd.f32 0.0, %v1451
        %1453 = vmatprep.mubr.f32.mxu0 0.0
        %1454 = vmatmul.mubr.f32.gmra.mrb[0].mxu0 %v1363
        %v1455 = vpop.f32.mrb[0].mxu0
        %v1456 = vadd.f32 0.0, %v1455
        %v1457 = vpop.f32.mrb[0].mxu0
        %v1458 = vadd.f32 0.0, %v1457
        %1459 = vmatprep.mubr.f32.mxu0 0.0
        %1460 = vmatmul.mubr.f32.gmra.mrb[0].mxu0 %v1364
        %v1461 = vpop.f32.mrb[0].mxu0
        %v1462 = vadd.f32 0.0, %v1461
        %v1463 = vpop.f32.mrb[0].mxu0
        %v1464 = vadd.f32 0.0, %v1463
        %1465 = vmatprep.mubr.f32.mxu0 0.0
        %1466 = vmatmul.mubr.f32.gmra.mrb[0].mxu0 %v1365
        %v1467 = vpop.f32.mrb[0].mxu0
        %v1468 = vadd.f32 0.0, %v1467
        %v1469 = vpop.f32.mrb[0].mxu0
        %v1470 = vadd.f32 0.0, %v1469
        %1471 = vmatprep.mubr.f32.mxu0 0.0
        %1472 = vmatmul.mubr.f32.gmra.mrb[0].mxu0 %v1366
        %v1473 = vpop.f32.mrb[0].mxu0
        %v1474 = vadd.f32 0.0, %v1473
        %v1475 = vpop.f32.mrb[0].mxu0
        %v1476 = vadd.f32 0.0, %v1475
        %1477 = vmatprep.mubr.f32.mxu0 0.0
        %1478 = vmatmul.mubr.f32.gmra.mrb[0].mxu0 %v1367
        %v1479 = vpop.f32.mrb[0].mxu0
        %v1480 = vadd.f32 0.0, %v1479
        %v1481 = vpop.f32.mrb[0].mxu0
        %v1482 = vadd.f32 0.0, %v1481
        %1483 = vmatprep.mubr.f32.mxu0 0.0
        %1484 = vmatmul.mubr.f32.gmra.mrb[0].mxu0 %v1368
        %v1485 = vpop.f32.mrb[0].mxu0
        %v1486 = vadd.f32 0.0, %v1485
        %v1487 = vpop.f32.mrb[0].mxu0
        %v1488 = vadd.f32 0.0, %v1487
        %1489 = vmatprep.mubr.f32.mxu0 0.0
        %1490 = vmatmul.mubr.f32.gmra.mrb[0].mxu0 %v1369
        %v1491 = vpop.f32.mrb[0].mxu0
        %v1492 = vadd.f32 0.0, %v1491
        %v1493 = vpop.f32.mrb[0].mxu0
        %v1494 = vadd.f32 0.0, %v1493
        %1495 = vmatprep.mubr.f32.mxu0 0.0
        %1496 = vmatmul.mubr.f32.gmra.mrb[0].mxu0 %v1370
        %v1497 = vpop.f32.mrb[0].mxu0
        %v1498 = vadd.f32 0.0, %v1497
        %v1499 = vpop.f32.mrb[0].mxu0
        %v1500 = vadd.f32 0.0, %v1499
        %1501 = vmatprep.mubr.f32.mxu0 0.0
        %1502 = vmatmul.mubr.f32.gmra.mrb[0].mxu0 %v1371
        %v1503 = vpop.f32.mrb[0].mxu0
        %v1504 = vadd.f32 0.0, %v1503
        %v1505 = vpop.f32.mrb[0].mxu0
        %v1506 = vadd.f32 0.0, %v1505
        %1507 = vmatprep.mubr.f32.mxu0 0.0
        %1508 = vmatmul.mubr.f32.gmra.mrb[0].mxu0 %v1372
        %v1509 = vpop.f32.mrb[0].mxu0
        %v1510 = vadd.f32 0.0, %v1509
        %v1511 = vpop.f32.mrb[0].mxu0
        %v1512 = vadd.f32 0.0, %v1511
        %1513 = vmatprep.mubr.f32.mxu0 0.0
        %1514 = vmatmul.mubr.f32.gmra.mrb[0].mxu0 %v1373
        %v1515 = vpop.f32.mrb[0].mxu0
        %v1516 = vadd.f32 0.0, %v1515
        %v1517 = vpop.f32.mrb[0].mxu0
        %v1518 = vadd.f32 0.0, %v1517
        %1519 = vmatprep.mubr.f32.mxu0 0.0
        %1520 = vmatmul.mubr.f32.gmra.mrb[0].mxu0 %v1374
        %v1521 = vpop.f32.mrb[0].mxu0
        %v1522 = vadd.f32 0.0, %v1521
        %v1523 = vpop.f32.mrb[0].mxu0
        %v1524 = vadd.f32 0.0, %v1523
        %1525 = vmatprep.mubr.f32.mxu0 0.0
        %1526 = vmatmul.mubr.f32.gmra.mrb[0].mxu0 %v1375
        %v1527 = vpop.f32.mrb[0].mxu0
        %v1528 = vadd.f32 0.0, %v1527
        %v1529 = vpop.f32.mrb[0].mxu0
        %v1530 = vadd.f32 0.0, %v1529
        %1531 = vmatprep.mubr.f32.mxu0 0.0
        %1532 = vmatmul.mubr.f32.gmra.mrb[0].mxu0 %v1376
        %v1533 = vpop.f32.mrb[0].mxu0
        %v1534 = vadd.f32 0.0, %v1533
        %v1535 = vpop.f32.mrb[0].mxu0
        %v1536 = vadd.f32 0.0, %v1535
        %1537 = vdwg.mxu0
        %1538 = vmatprep.subr.mxu0 %v1300
        %1539 = vmatpush1.msra.mxu0 %v1299
        %1540 = vmatprep.subr.mxu0 %v1304
        %1541 = vmatpush1.msra.mxu0 %v1303
        %1542 = vmatprep.subr.mxu0 %v1308
        %1543 = vmatpush1.msra.mxu0 %v1307
        %1544 = vmatprep.subr.mxu0 %v1312
        %1545 = vmatpush1.msra.mxu0 %v1311
        %1546 = vmatprep.subr.mxu0 %v1316
        %1547 = vmatpush1.msra.mxu0 %v1315
        %1548 = vmatprep.subr.mxu0 %v1320
        %1549 = vmatpush1.msra.mxu0 %v1319
        %1550 = vmatprep.subr.mxu0 %v1324
        %1551 = vmatpush1.msra.mxu0 %v1323
        %1552 = vmatprep.subr.mxu0 %v1328
        %1553 = vmatpush1.msra.mxu0 %v1327
        %1554 = vmatprep.subr.mxu0 %v1332
        %1555 = vmatpush1.msra.mxu0 %v1331
        %1556 = vmatprep.subr.mxu0 %v1336
        %1557 = vmatpush1.msra.mxu0 %v1335
        %1558 = vmatprep.subr.mxu0 %v1340
        %1559 = vmatpush1.msra.mxu0 %v1339
        %1560 = vmatprep.subr.mxu0 %v1344
        %1561 = vmatpush1.msra.mxu0 %v1343
        %1562 = vmatprep.subr.mxu0 %v1348
        %1563 = vmatpush1.msra.mxu0 %v1347
        %1564 = vmatprep.subr.mxu0 %v1352
        %1565 = vmatpush1.msra.mxu0 %v1351
        %1566 = vmatprep.subr.mxu0 %v1356
        %1567 = vmatpush1.msra.mxu0 %v1355
        %1568 = vmatprep.subr.mxu0 %v1360
        %1569 = vmatpush1.msra.mxu0 %v1359
        %1570 = vmatprep.subr.mxu0 0.0
        %1571 = vmatpush1.msra.mxu0 0.0
        %1572 = vmatprep.subr.mxu0 0.0
        %1573 = vmatpush1.msra.mxu0 0.0
        %1574 = vmatprep.subr.mxu0 0.0
        %1575 = vmatpush1.msra.mxu0 0.0
        %1576 = vmatprep.subr.mxu0 0.0
        %1577 = vmatpush1.msra.mxu0 0.0
        %1578 = vmatprep.subr.mxu0 0.0
        %1579 = vmatpush1.msra.mxu0 0.0
        %1580 = vmatprep.subr.mxu0 0.0
        %1581 = vmatpush1.msra.mxu0 0.0
        %1582 = vmatprep.subr.mxu0 0.0
        %1583 = vmatpush1.msra.mxu0 0.0
        %1584 = vmatprep.subr.mxu0 0.0
        %1585 = vmatpush1.msra.mxu0 0.0
        %1586 = vmatprep.subr.mxu0 0.0
        %1587 = vmatpush1.msra.mxu0 0.0
        %1588 = vmatprep.subr.mxu0 0.0
        %1589 = vmatpush1.msra.mxu0 0.0
        %1590 = vmatprep.subr.mxu0 0.0
        %1591 = vmatpush1.msra.mxu0 0.0
        %1592 = vmatprep.subr.mxu0 0.0
        %1593 = vmatpush1.msra.mxu0 0.0
        %1594 = vmatprep.subr.mxu0 0.0
        %1595 = vmatpush1.msra.mxu0 0.0
        %1596 = vmatprep.subr.mxu0 0.0
        %1597 = vmatpush1.msra.mxu0 0.0
        %1598 = vmatprep.subr.mxu0 0.0
        %1599 = vmatpush1.msra.mxu0 0.0
        %1600 = vmatprep.subr.mxu0 0.0
        %1601 = vmatpush1.msra.mxu0 0.0
        %1602 = vmatprep.mubr.f32.mxu0 0.0
        %1603 = vmatmul.mubr.f32.gmra.mrb[0].mxu0 %v1361
        %v1604 = vpop.f32.mrb[0].mxu0
        %v1605 = vadd.f32 0.0, %v1604
        %v1606 = vpop.f32.mrb[0].mxu0
        %v1607 = vadd.f32 0.0, %v1606
        %1608 = vmatprep.mubr.f32.mxu0 0.0
        %1609 = vmatmul.mubr.f32.gmra.mrb[0].mxu0 %v1362
        %v1610 = vpop.f32.mrb[0].mxu0
        %v1611 = vadd.f32 0.0, %v1610
        %v1612 = vpop.f32.mrb[0].mxu0
        %v1613 = vadd.f32 0.0, %v1612
        %1614 = vmatprep.mubr.f32.mxu0 0.0
        %1615 = vmatmul.mubr.f32.gmra.mrb[0].mxu0 %v1363
        %v1616 = vpop.f32.mrb[0].mxu0
        %v1617 = vadd.f32 0.0, %v1616
        %v1618 = vpop.f32.mrb[0].mxu0
        %v1619 = vadd.f32 0.0, %v1618
        %1620 = vmatprep.mubr.f32.mxu0 0.0
        %1621 = vmatmul.mubr.f32.gmra.mrb[0].mxu0 %v1364
        %v1622 = vpop.f32.mrb[0].mxu0
        %v1623 = vadd.f32 0.0, %v1622
        %v1624 = vpop.f32.mrb[0].mxu0
        %v1625 = vadd.f32 0.0, %v1624
        %1626 = vmatprep.mubr.f32.mxu0 0.0
        %1627 = vmatmul.mubr.f32.gmra.mrb[0].mxu0 %v1365
        %v1628 = vpop.f32.mrb[0].mxu0
        %v1629 = vadd.f32 0.0, %v1628
        %v1630 = vpop.f32.mrb[0].mxu0
        %v1631 = vadd.f32 0.0, %v1630
        %1632 = vmatprep.mubr.f32.mxu0 0.0
        %1633 = vmatmul.mubr.f32.gmra.mrb[0].mxu0 %v1366
        %v1634 = vpop.f32.mrb[0].mxu0
        %v1635 = vadd.f32 0.0, %v1634
        %v1636 = vpop.f32.mrb[0].mxu0
        %v1637 = vadd.f32 0.0, %v1636
        %1638 = vmatprep.mubr.f32.mxu0 0.0
        %1639 = vmatmul.mubr.f32.gmra.mrb[0].mxu0 %v1367
        %v1640 = vpop.f32.mrb[0].mxu0
        %v1641 = vadd.f32 0.0, %v1640
        %v1642 = vpop.f32.mrb[0].mxu0
        %v1643 = vadd.f32 0.0, %v1642
        %1644 = vmatprep.mubr.f32.mxu0 0.0
        %1645 = vmatmul.mubr.f32.gmra.mrb[0].mxu0 %v1368
        %v1646 = vpop.f32.mrb[0].mxu0
        %v1647 = vadd.f32 0.0, %v1646
        %v1648 = vpop.f32.mrb[0].mxu0
        %v1649 = vadd.f32 0.0, %v1648
        %1650 = vmatprep.mubr.f32.mxu0 0.0
        %1651 = vmatmul.mubr.f32.gmra.mrb[0].mxu0 %v1369
        %v1652 = vpop.f32.mrb[0].mxu0
        %v1653 = vadd.f32 0.0, %v1652
        %v1654 = vpop.f32.mrb[0].mxu0
        %v1655 = vadd.f32 0.0, %v1654
        %1656 = vmatprep.mubr.f32.mxu0 0.0
        %1657 = vmatmul.mubr.f32.gmra.mrb[0].mxu0 %v1370
        %v1658 = vpop.f32.mrb[0].mxu0
        %v1659 = vadd.f32 0.0, %v1658
        %v1660 = vpop.f32.mrb[0].mxu0
        %v1661 = vadd.f32 0.0, %v1660
        %1662 = vmatprep.mubr.f32.mxu0 0.0
        %1663 = vmatmul.mubr.f32.gmra.mrb[0].mxu0 %v1371
        %v1664 = vpop.f32.mrb[0].mxu0
        %v1665 = vadd.f32 0.0, %v1664
        %v1666 = vpop.f32.mrb[0].mxu0
        %v1667 = vadd.f32 0.0, %v1666
        %1668 = vmatprep.mubr.f32.mxu0 0.0
        %1669 = vmatmul.mubr.f32.gmra.mrb[0].mxu0 %v1372
        %v1670 = vpop.f32.mrb[0].mxu0
        %v1671 = vadd.f32 0.0, %v1670
        %v1672 = vpop.f32.mrb[0].mxu0
        %v1673 = vadd.f32 0.0, %v1672
        %1674 = vmatprep.mubr.f32.mxu0 0.0
        %1675 = vmatmul.mubr.f32.gmra.mrb[0].mxu0 %v1373
        %v1676 = vpop.f32.mrb[0].mxu0
        %v1677 = vadd.f32 0.0, %v1676
        %v1678 = vpop.f32.mrb[0].mxu0
        %v1679 = vadd.f32 0.0, %v1678
        %1680 = vmatprep.mubr.f32.mxu0 0.0
        %1681 = vmatmul.mubr.f32.gmra.mrb[0].mxu0 %v1374
        %v1682 = vpop.f32.mrb[0].mxu0
        %v1683 = vadd.f32 0.0, %v1682
        %v1684 = vpop.f32.mrb[0].mxu0
        %v1685 = vadd.f32 0.0, %v1684
        %1686 = vmatprep.mubr.f32.mxu0 0.0
        %1687 = vmatmul.mubr.f32.gmra.mrb[0].mxu0 %v1375
        %v1688 = vpop.f32.mrb[0].mxu0
        %v1689 = vadd.f32 0.0, %v1688
        %v1690 = vpop.f32.mrb[0].mxu0
        %v1691 = vadd.f32 0.0, %v1690
        %1692 = vmatprep.mubr.f32.mxu0 0.0
        %1693 = vmatmul.mubr.f32.gmra.mrb[0].mxu0 %v1376
        %v1694 = vpop.f32.mrb[0].mxu0
        %v1695 = vadd.f32 0.0, %v1694
        %v1696 = vpop.f32.mrb[0].mxu0
        %v1697 = vadd.f32 0.0, %v1696
        %1698 = vdwg.mxu0
        %vm1699 = vcmp.gt.f32.partialorder %v1444, 0.0
        %vm1700 = vcmp.gt.f32.partialorder %v1446, 0.0
        %vm1701 = vcmp.gt.f32.partialorder %v1605, 0.0
        %vm1702 = vcmp.gt.f32.partialorder %v1607, 0.0
        %vm1703 = vcmp.gt.f32.partialorder %v1450, 0.0
        %vm1704 = vcmp.gt.f32.partialorder %v1452, 0.0
        %vm1705 = vcmp.gt.f32.partialorder %v1611, 0.0
        %vm1706 = vcmp.gt.f32.partialorder %v1613, 0.0
        %vm1707 = vcmp.gt.f32.partialorder %v1456, 0.0
        %vm1708 = vcmp.gt.f32.partialorder %v1458, 0.0
        %vm1709 = vcmp.gt.f32.partialorder %v1617, 0.0
        %vm1710 = vcmp.gt.f32.partialorder %v1619, 0.0
        %vm1711 = vcmp.gt.f32.partialorder %v1462, 0.0
        %vm1712 = vcmp.gt.f32.partialorder %v1464, 0.0
        %vm1713 = vcmp.gt.f32.partialorder %v1623, 0.0
        %vm1714 = vcmp.gt.f32.partialorder %v1625, 0.0
        %vm1715 = vcmp.gt.f32.partialorder %v1468, 0.0
        %vm1716 = vcmp.gt.f32.partialorder %v1470, 0.0
        %vm1717 = vcmp.gt.f32.partialorder %v1629, 0.0
        %vm1718 = vcmp.gt.f32.partialorder %v1631, 0.0
        %vm1719 = vcmp.gt.f32.partialorder %v1474, 0.0
        %vm1720 = vcmp.gt.f32.partialorder %v1476, 0.0
        %vm1721 = vcmp.gt.f32.partialorder %v1635, 0.0
        %vm1722 = vcmp.gt.f32.partialorder %v1637, 0.0
        %vm1723 = vcmp.gt.f32.partialorder %v1480, 0.0
        %vm1724 = vcmp.gt.f32.partialorder %v1482, 0.0
        %vm1725 = vcmp.gt.f32.partialorder %v1641, 0.0
        %vm1726 = vcmp.gt.f32.partialorder %v1643, 0.0
        %vm1727 = vcmp.gt.f32.partialorder %v1486, 0.0
        %vm1728 = vcmp.gt.f32.partialorder %v1488, 0.0
        %vm1729 = vcmp.gt.f32.partialorder %v1647, 0.0
        %vm1730 = vcmp.gt.f32.partialorder %v1649, 0.0
        %vm1731 = vcmp.gt.f32.partialorder %v1492, 0.0
        %vm1732 = vcmp.gt.f32.partialorder %v1494, 0.0
        %vm1733 = vcmp.gt.f32.partialorder %v1653, 0.0
        %vm1734 = vcmp.gt.f32.partialorder %v1655, 0.0
        %vm1735 = vcmp.gt.f32.partialorder %v1498, 0.0
        %vm1736 = vcmp.gt.f32.partialorder %v1500, 0.0
        %vm1737 = vcmp.gt.f32.partialorder %v1659, 0.0
        %vm1738 = vcmp.gt.f32.partialorder %v1661, 0.0
        %vm1739 = vcmp.gt.f32.partialorder %v1504, 0.0
        %vm1740 = vcmp.gt.f32.partialorder %v1506, 0.0
        %vm1741 = vcmp.gt.f32.partialorder %v1665, 0.0
        %vm1742 = vcmp.gt.f32.partialorder %v1667, 0.0
        %vm1743 = vcmp.gt.f32.partialorder %v1510, 0.0
        %vm1744 = vcmp.gt.f32.partialorder %v1512, 0.0
        %vm1745 = vcmp.gt.f32.partialorder %v1671, 0.0
        %vm1746 = vcmp.gt.f32.partialorder %v1673, 0.0
        %vm1747 = vcmp.gt.f32.partialorder %v1516, 0.0
        %vm1748 = vcmp.gt.f32.partialorder %v1518, 0.0
        %vm1749 = vcmp.gt.f32.partialorder %v1677, 0.0
        %vm1750 = vcmp.gt.f32.partialorder %v1679, 0.0
        %vm1751 = vcmp.gt.f32.partialorder %v1522, 0.0
        %vm1752 = vcmp.gt.f32.partialorder %v1524, 0.0
        %vm1753 = vcmp.gt.f32.partialorder %v1683, 0.0
        %vm1754 = vcmp.gt.f32.partialorder %v1685, 0.0
        %vm1755 = vcmp.gt.f32.partialorder %v1528, 0.0
        %vm1756 = vcmp.gt.f32.partialorder %v1530, 0.0
        %vm1757 = vcmp.gt.f32.partialorder %v1689, 0.0
        %vm1758 = vcmp.gt.f32.partialorder %v1691, 0.0
        %vm1759 = vcmp.gt.f32.partialorder %v1534, 0.0
        %vm1760 = vcmp.gt.f32.partialorder %v1536, 0.0
        %vm1761 = vcmp.gt.f32.partialorder %v1695, 0.0
        %vm1762 = vcmp.gt.f32.partialorder %v1697, 0.0
        %v1763 = vmul.f32 %v1444, 0.01
        %v1764 = vmul.f32 %v1446, 0.01
        %v1765 = vmul.f32 %v1605, 0.01
        %v1766 = vmul.f32 %v1607, 0.01
        %v1767 = vmul.f32 %v1450, 0.01
        %v1768 = vmul.f32 %v1452, 0.01
        %v1769 = vmul.f32 %v1611, 0.01
        %v1770 = vmul.f32 %v1613, 0.01
        %v1771 = vmul.f32 %v1456, 0.01
        %v1772 = vmul.f32 %v1458, 0.01
        %v1773 = vmul.f32 %v1617, 0.01
        %v1774 = vmul.f32 %v1619, 0.01
        %v1775 = vmul.f32 %v1462, 0.01
        %v1776 = vmul.f32 %v1464, 0.01
        %v1777 = vmul.f32 %v1623, 0.01
        %v1778 = vmul.f32 %v1625, 0.01
        %v1779 = vmul.f32 %v1468, 0.01
        %v1780 = vmul.f32 %v1470, 0.01
        %v1781 = vmul.f32 %v1629, 0.01
        %v1782 = vmul.f32 %v1631, 0.01
        %v1783 = vmul.f32 %v1474, 0.01
        %v1784 = vmul.f32 %v1476, 0.01
        %v1785 = vmul.f32 %v1635, 0.01
        %v1786 = vmul.f32 %v1637, 0.01
        %v1787 = vmul.f32 %v1480, 0.01
        %v1788 = vmul.f32 %v1482, 0.01
        %v1789 = vmul.f32 %v1641, 0.01
        %v1790 = vmul.f32 %v1643, 0.01
        %v1791 = vmul.f32 %v1486, 0.01
        %v1792 = vmul.f32 %v1488, 0.01
        %v1793 = vmul.f32 %v1647, 0.01
        %v1794 = vmul.f32 %v1649, 0.01
        %v1795 = vmul.f32 %v1492, 0.01
        %v1796 = vmul.f32 %v1494, 0.01
        %v1797 = vmul.f32 %v1653, 0.01
        %v1798 = vmul.f32 %v1655, 0.01
        %v1799 = vmul.f32 %v1498, 0.01
        %v1800 = vmul.f32 %v1500, 0.01
        %v1801 = vmul.f32 %v1659, 0.01
        %v1802 = vmul.f32 %v1661, 0.01
        %v1803 = vmul.f32 %v1504, 0.01
        %v1804 = vmul.f32 %v1506, 0.01
        %v1805 = vmul.f32 %v1665, 0.01
        %v1806 = vmul.f32 %v1667, 0.01
        %v1807 = vmul.f32 %v1510, 0.01
        %v1808 = vmul.f32 %v1512, 0.01
        %v1809 = vmul.f32 %v1671, 0.01
        %v1810 = vmul.f32 %v1673, 0.01
        %v1811 = vmul.f32 %v1516, 0.01
        %v1812 = vmul.f32 %v1518, 0.01
        %v1813 = vmul.f32 %v1677, 0.01
        %v1814 = vmul.f32 %v1679, 0.01
        %v1815 = vmul.f32 %v1522, 0.01
        %v1816 = vmul.f32 %v1524, 0.01
        %v1817 = vmul.f32 %v1683, 0.01
        %v1818 = vmul.f32 %v1685, 0.01
        %v1819 = vmul.f32 %v1528, 0.01
        %v1820 = vmul.f32 %v1530, 0.01
        %v1821 = vmul.f32 %v1689, 0.01
        %v1822 = vmul.f32 %v1691, 0.01
        %v1823 = vmul.f32 %v1534, 0.01
        %v1824 = vmul.f32 %v1536, 0.01
        %v1825 = vmul.f32 %v1695, 0.01
        %v1826 = vmul.f32 %v1697, 0.01
        %v1827 = vsel %vm1699, %v1444, %v1763
        %v1828 = vsel %vm1700, %v1446, %v1764
        %v1829 = vsel %vm1701, %v1605, %v1765
        %v1830 = vsel %vm1702, %v1607, %v1766
        %v1831 = vsel %vm1703, %v1450, %v1767
        %v1832 = vsel %vm1704, %v1452, %v1768
        %v1833 = vsel %vm1705, %v1611, %v1769
        %v1834 = vsel %vm1706, %v1613, %v1770
        %v1835 = vsel %vm1707, %v1456, %v1771
        %v1836 = vsel %vm1708, %v1458, %v1772
        %v1837 = vsel %vm1709, %v1617, %v1773
        %v1838 = vsel %vm1710, %v1619, %v1774
        %v1839 = vsel %vm1711, %v1462, %v1775
        %v1840 = vsel %vm1712, %v1464, %v1776
        %v1841 = vsel %vm1713, %v1623, %v1777
        %v1842 = vsel %vm1714, %v1625, %v1778
        %v1843 = vsel %vm1715, %v1468, %v1779
        %v1844 = vsel %vm1716, %v1470, %v1780
        %v1845 = vsel %vm1717, %v1629, %v1781
        %v1846 = vsel %vm1718, %v1631, %v1782
        %v1847 = vsel %vm1719, %v1474, %v1783
        %v1848 = vsel %vm1720, %v1476, %v1784
        %v1849 = vsel %vm1721, %v1635, %v1785
        %v1850 = vsel %vm1722, %v1637, %v1786
        %v1851 = vsel %vm1723, %v1480, %v1787
        %v1852 = vsel %vm1724, %v1482, %v1788
        %v1853 = vsel %vm1725, %v1641, %v1789
        %v1854 = vsel %vm1726, %v1643, %v1790
        %v1855 = vsel %vm1727, %v1486, %v1791
        %v1856 = vsel %vm1728, %v1488, %v1792
        %v1857 = vsel %vm1729, %v1647, %v1793
        %v1858 = vsel %vm1730, %v1649, %v1794
        %v1859 = vsel %vm1731, %v1492, %v1795
        %v1860 = vsel %vm1732, %v1494, %v1796
        %v1861 = vsel %vm1733, %v1653, %v1797
        %v1862 = vsel %vm1734, %v1655, %v1798
        %v1863 = vsel %vm1735, %v1498, %v1799
        %v1864 = vsel %vm1736, %v1500, %v1800
        %v1865 = vsel %vm1737, %v1659, %v1801
        %v1866 = vsel %vm1738, %v1661, %v1802
        %v1867 = vsel %vm1739, %v1504, %v1803
        %v1868 = vsel %vm1740, %v1506, %v1804
        %v1869 = vsel %vm1741, %v1665, %v1805
        %v1870 = vsel %vm1742, %v1667, %v1806
        %v1871 = vsel %vm1743, %v1510, %v1807
        %v1872 = vsel %vm1744, %v1512, %v1808
        %v1873 = vsel %vm1745, %v1671, %v1809
        %v1874 = vsel %vm1746, %v1673, %v1810
        %v1875 = vsel %vm1747, %v1516, %v1811
        %v1876 = vsel %vm1748, %v1518, %v1812
        %v1877 = vsel %vm1749, %v1677, %v1813
        %v1878 = vsel %vm1750, %v1679, %v1814
        %v1879 = vsel %vm1751, %v1522, %v1815
        %v1880 = vsel %vm1752, %v1524, %v1816
        %v1881 = vsel %vm1753, %v1683, %v1817
        %v1882 = vsel %vm1754, %v1685, %v1818
        %v1883 = vsel %vm1755, %v1528, %v1819
        %v1884 = vsel %vm1756, %v1530, %v1820
        %v1885 = vsel %vm1757, %v1689, %v1821
        %v1886 = vsel %vm1758, %v1691, %v1822
        %v1887 = vsel %vm1759, %v1534, %v1823
        %v1888 = vsel %vm1760, %v1536, %v1824
        %v1889 = vsel %vm1761, %v1695, %v1825
        %v1890 = vsel %vm1762, %v1697, %v1826
        %v1891 = vld [vmem:[%s5] sm:$0xff]
        %v1892 = vld [vmem:[%s5 + $0x8] sm:$0xff]
        %v1893 = vld [vmem:[%s5 + $0x10] sm:$0xff]
        %v1894 = vld [vmem:[%s5 + $0x18] sm:$0xff]
        %v1895 = vld [vmem:[%s5 + $0x20] sm:$0xff]
        %v1896 = vld [vmem:[%s5 + $0x28] sm:$0xff]
        %v1897 = vld [vmem:[%s5 + $0x30] sm:$0xff]
        %v1898 = vld [vmem:[%s5 + $0x38] sm:$0xff]
        %v1899 = vld [vmem:[%s5 + $0x40] sm:$0xff]
        %v1900 = vld [vmem:[%s5 + $0x48] sm:$0xff]
        %v1901 = vld [vmem:[%s5 + $0x50] sm:$0xff]
        %v1902 = vld [vmem:[%s5 + $0x58] sm:$0xff]
        %v1903 = vld [vmem:[%s5 + $0x60] sm:$0xff]
        %v1904 = vld [vmem:[%s5 + $0x68] sm:$0xff]
        %v1905 = vld [vmem:[%s5 + $0x70] sm:$0xff]
        %v1906 = vld [vmem:[%s5 + $0x78] sm:$0xff]
        %1907 = vmatprep.subr.mxu0 %v1828
        %1908 = vmatpush1.msra.mxu0 %v1827
        %1909 = vmatprep.subr.mxu0 %v1832
        %1910 = vmatpush1.msra.mxu0 %v1831
        %1911 = vmatprep.subr.mxu0 %v1836
        %1912 = vmatpush1.msra.mxu0 %v1835
        %1913 = vmatprep.subr.mxu0 %v1840
        %1914 = vmatpush1.msra.mxu0 %v1839
        %1915 = vmatprep.subr.mxu0 %v1844
        %1916 = vmatpush1.msra.mxu0 %v1843
        %1917 = vmatprep.subr.mxu0 %v1848
        %1918 = vmatpush1.msra.mxu0 %v1847
        %1919 = vmatprep.subr.mxu0 %v1852
        %1920 = vmatpush1.msra.mxu0 %v1851
        %1921 = vmatprep.subr.mxu0 %v1856
        %1922 = vmatpush1.msra.mxu0 %v1855
        %1923 = vmatprep.subr.mxu0 %v1860
        %1924 = vmatpush1.msra.mxu0 %v1859
        %1925 = vmatprep.subr.mxu0 %v1864
        %1926 = vmatpush1.msra.mxu0 %v1863
        %1927 = vmatprep.subr.mxu0 %v1868
        %1928 = vmatpush1.msra.mxu0 %v1867
        %1929 = vmatprep.subr.mxu0 %v1872
        %1930 = vmatpush1.msra.mxu0 %v1871
        %1931 = vmatprep.subr.mxu0 %v1876
        %1932 = vmatpush1.msra.mxu0 %v1875
        %1933 = vmatprep.subr.mxu0 %v1880
        %1934 = vmatpush1.msra.mxu0 %v1879
        %1935 = vmatprep.subr.mxu0 %v1884
        %1936 = vmatpush1.msra.mxu0 %v1883
        %1937 = vmatprep.subr.mxu0 %v1888
        %1938 = vmatpush1.msra.mxu0 %v1887
        %1939 = vmatprep.subr.mxu0 0.0
        %1940 = vmatpush1.msra.mxu0 0.0
        %1941 = vmatprep.subr.mxu0 0.0
        %1942 = vmatpush1.msra.mxu0 0.0
        %1943 = vmatprep.subr.mxu0 0.0
        %1944 = vmatpush1.msra.mxu0 0.0
        %1945 = vmatprep.subr.mxu0 0.0
        %1946 = vmatpush1.msra.mxu0 0.0
        %1947 = vmatprep.subr.mxu0 0.0
        %1948 = vmatpush1.msra.mxu0 0.0
        %1949 = vmatprep.subr.mxu0 0.0
        %1950 = vmatpush1.msra.mxu0 0.0
        %1951 = vmatprep.subr.mxu0 0.0
        %1952 = vmatpush1.msra.mxu0 0.0
        %1953 = vmatprep.subr.mxu0 0.0
        %1954 = vmatpush1.msra.mxu0 0.0
        %1955 = vmatprep.subr.mxu0 0.0
        %1956 = vmatpush1.msra.mxu0 0.0
        %1957 = vmatprep.subr.mxu0 0.0
        %1958 = vmatpush1.msra.mxu0 0.0
        %1959 = vmatprep.subr.mxu0 0.0
        %1960 = vmatpush1.msra.mxu0 0.0
        %1961 = vmatprep.subr.mxu0 0.0
        %1962 = vmatpush1.msra.mxu0 0.0
        %1963 = vmatprep.subr.mxu0 0.0
        %1964 = vmatpush1.msra.mxu0 0.0
        %1965 = vmatprep.subr.mxu0 0.0
        %1966 = vmatpush1.msra.mxu0 0.0
        %1967 = vmatprep.subr.mxu0 0.0
        %1968 = vmatpush1.msra.mxu0 0.0
        %1969 = vmatprep.subr.mxu0 0.0
        %1970 = vmatpush1.msra.mxu0 0.0
        %1971 = vmatprep.mubr.f32.mxu0 0.0
        %1972 = vmatmul.mubr.f32.gmra.mrb[0].mxu0 %v1891
        %v1973 = vpop.f32.mrb[0].mxu0
        %v1974 = vadd.f32 0.0, %v1973
        %v1975 = vpop.f32.mrb[0].mxu0
        %v1976 = vadd.f32 0.0, %v1975
        %1977 = vmatprep.mubr.f32.mxu0 0.0
        %1978 = vmatmul.mubr.f32.gmra.mrb[0].mxu0 %v1892
        %v1979 = vpop.f32.mrb[0].mxu0
        %v1980 = vadd.f32 0.0, %v1979
        %v1981 = vpop.f32.mrb[0].mxu0
        %v1982 = vadd.f32 0.0, %v1981
        %1983 = vmatprep.mubr.f32.mxu0 0.0
        %1984 = vmatmul.mubr.f32.gmra.mrb[0].mxu0 %v1893
        %v1985 = vpop.f32.mrb[0].mxu0
        %v1986 = vadd.f32 0.0, %v1985
        %v1987 = vpop.f32.mrb[0].mxu0
        %v1988 = vadd.f32 0.0, %v1987
        %1989 = vmatprep.mubr.f32.mxu0 0.0
        %1990 = vmatmul.mubr.f32.gmra.mrb[0].mxu0 %v1894
        %v1991 = vpop.f32.mrb[0].mxu0
        %v1992 = vadd.f32 0.0, %v1991
        %v1993 = vpop.f32.mrb[0].mxu0
        %v1994 = vadd.f32 0.0, %v1993
        %1995 = vmatprep.mubr.f32.mxu0 0.0
        %1996 = vmatmul.mubr.f32.gmra.mrb[0].mxu0 %v1895
        %v1997 = vpop.f32.mrb[0].mxu0
        %v1998 = vadd.f32 0.0, %v1997
        %v1999 = vpop.f32.mrb[0].mxu0
        %v2000 = vadd.f32 0.0, %v1999
        %2001 = vmatprep.mubr.f32.mxu0 0.0
        %2002 = vmatmul.mubr.f32.gmra.mrb[0].mxu0 %v1896
        %v2003 = vpop.f32.mrb[0].mxu0
        %v2004 = vadd.f32 0.0, %v2003
        %v2005 = vpop.f32.mrb[0].mxu0
        %v2006 = vadd.f32 0.0, %v2005
        %2007 = vmatprep.mubr.f32.mxu0 0.0
        %2008 = vmatmul.mubr.f32.gmra.mrb[0].mxu0 %v1897
        %v2009 = vpop.f32.mrb[0].mxu0
        %v2010 = vadd.f32 0.0, %v2009
        %v2011 = vpop.f32.mrb[0].mxu0
        %v2012 = vadd.f32 0.0, %v2011
        %2013 = vmatprep.mubr.f32.mxu0 0.0
        %2014 = vmatmul.mubr.f32.gmra.mrb[0].mxu0 %v1898
        %v2015 = vpop.f32.mrb[0].mxu0
        %v2016 = vadd.f32 0.0, %v2015
        %v2017 = vpop.f32.mrb[0].mxu0
        %v2018 = vadd.f32 0.0, %v2017
        %2019 = vmatprep.mubr.f32.mxu0 0.0
        %2020 = vmatmul.mubr.f32.gmra.mrb[0].mxu0 %v1899
        %v2021 = vpop.f32.mrb[0].mxu0
        %v2022 = vadd.f32 0.0, %v2021
        %v2023 = vpop.f32.mrb[0].mxu0
        %v2024 = vadd.f32 0.0, %v2023
        %2025 = vmatprep.mubr.f32.mxu0 0.0
        %2026 = vmatmul.mubr.f32.gmra.mrb[0].mxu0 %v1900
        %v2027 = vpop.f32.mrb[0].mxu0
        %v2028 = vadd.f32 0.0, %v2027
        %v2029 = vpop.f32.mrb[0].mxu0
        %v2030 = vadd.f32 0.0, %v2029
        %2031 = vmatprep.mubr.f32.mxu0 0.0
        %2032 = vmatmul.mubr.f32.gmra.mrb[0].mxu0 %v1901
        %v2033 = vpop.f32.mrb[0].mxu0
        %v2034 = vadd.f32 0.0, %v2033
        %v2035 = vpop.f32.mrb[0].mxu0
        %v2036 = vadd.f32 0.0, %v2035
        %2037 = vmatprep.mubr.f32.mxu0 0.0
        %2038 = vmatmul.mubr.f32.gmra.mrb[0].mxu0 %v1902
        %v2039 = vpop.f32.mrb[0].mxu0
        %v2040 = vadd.f32 0.0, %v2039
        %v2041 = vpop.f32.mrb[0].mxu0
        %v2042 = vadd.f32 0.0, %v2041
        %2043 = vmatprep.mubr.f32.mxu0 0.0
        %2044 = vmatmul.mubr.f32.gmra.mrb[0].mxu0 %v1903
        %v2045 = vpop.f32.mrb[0].mxu0
        %v2046 = vadd.f32 0.0, %v2045
        %v2047 = vpop.f32.mrb[0].mxu0
        %v2048 = vadd.f32 0.0, %v2047
        %2049 = vmatprep.mubr.f32.mxu0 0.0
        %2050 = vmatmul.mubr.f32.gmra.mrb[0].mxu0 %v1904
        %v2051 = vpop.f32.mrb[0].mxu0
        %v2052 = vadd.f32 0.0, %v2051
        %v2053 = vpop.f32.mrb[0].mxu0
        %v2054 = vadd.f32 0.0, %v2053
        %2055 = vmatprep.mubr.f32.mxu0 0.0
        %2056 = vmatmul.mubr.f32.gmra.mrb[0].mxu0 %v1905
        %v2057 = vpop.f32.mrb[0].mxu0
        %v2058 = vadd.f32 0.0, %v2057
        %v2059 = vpop.f32.mrb[0].mxu0
        %v2060 = vadd.f32 0.0, %v2059
        %2061 = vmatprep.mubr.f32.mxu0 0.0
        %2062 = vmatmul.mubr.f32.gmra.mrb[0].mxu0 %v1906
        %v2063 = vpop.f32.mrb[0].mxu0
        %v2064 = vadd.f32 0.0, %v2063
        %v2065 = vpop.f32.mrb[0].mxu0
        %v2066 = vadd.f32 0.0, %v2065
        %2067 = vdwg.mxu0
        %2068 = vmatprep.subr.mxu0 %v1830
        %2069 = vmatpush1.msra.mxu0 %v1829
        %2070 = vmatprep.subr.mxu0 %v1834
        %2071 = vmatpush1.msra.mxu0 %v1833
        %2072 = vmatprep.subr.mxu0 %v1838
        %2073 = vmatpush1.msra.mxu0 %v1837
        %2074 = vmatprep.subr.mxu0 %v1842
        %2075 = vmatpush1.msra.mxu0 %v1841
        %2076 = vmatprep.subr.mxu0 %v1846
        %2077 = vmatpush1.msra.mxu0 %v1845
        %2078 = vmatprep.subr.mxu0 %v1850
        %2079 = vmatpush1.msra.mxu0 %v1849
        %2080 = vmatprep.subr.mxu0 %v1854
        %2081 = vmatpush1.msra.mxu0 %v1853
        %2082 = vmatprep.subr.mxu0 %v1858
        %2083 = vmatpush1.msra.mxu0 %v1857
        %2084 = vmatprep.subr.mxu0 %v1862
        %2085 = vmatpush1.msra.mxu0 %v1861
        %2086 = vmatprep.subr.mxu0 %v1866
        %2087 = vmatpush1.msra.mxu0 %v1865
        %2088 = vmatprep.subr.mxu0 %v1870
        %2089 = vmatpush1.msra.mxu0 %v1869
        %2090 = vmatprep.subr.mxu0 %v1874
        %2091 = vmatpush1.msra.mxu0 %v1873
        %2092 = vmatprep.subr.mxu0 %v1878
        %2093 = vmatpush1.msra.mxu0 %v1877
        %2094 = vmatprep.subr.mxu0 %v1882
        %2095 = vmatpush1.msra.mxu0 %v1881
        %2096 = vmatprep.subr.mxu0 %v1886
        %2097 = vmatpush1.msra.mxu0 %v1885
        %2098 = vmatprep.subr.mxu0 %v1890
        %2099 = vmatpush1.msra.mxu0 %v1889
        %2100 = vmatprep.subr.mxu0 0.0
        %2101 = vmatpush1.msra.mxu0 0.0
        %2102 = vmatprep.subr.mxu0 0.0
        %2103 = vmatpush1.msra.mxu0 0.0
        %2104 = vmatprep.subr.mxu0 0.0
        %2105 = vmatpush1.msra.mxu0 0.0
        %2106 = vmatprep.subr.mxu0 0.0
        %2107 = vmatpush1.msra.mxu0 0.0
        %2108 = vmatprep.subr.mxu0 0.0
        %2109 = vmatpush1.msra.mxu0 0.0
        %2110 = vmatprep.subr.mxu0 0.0
        %2111 = vmatpush1.msra.mxu0 0.0
        %2112 = vmatprep.subr.mxu0 0.0
        %2113 = vmatpush1.msra.mxu0 0.0
        %2114 = vmatprep.subr.mxu0 0.0
        %2115 = vmatpush1.msra.mxu0 0.0
        %2116 = vmatprep.subr.mxu0 0.0
        %2117 = vmatpush1.msra.mxu0 0.0
        %2118 = vmatprep.subr.mxu0 0.0
        %2119 = vmatpush1.msra.mxu0 0.0
        %2120 = vmatprep.subr.mxu0 0.0
        %2121 = vmatpush1.msra.mxu0 0.0
        %2122 = vmatprep.subr.mxu0 0.0
        %2123 = vmatpush1.msra.mxu0 0.0
        %2124 = vmatprep.subr.mxu0 0.0
        %2125 = vmatpush1.msra.mxu0 0.0
        %2126 = vmatprep.subr.mxu0 0.0
        %2127 = vmatpush1.msra.mxu0 0.0
        %2128 = vmatprep.subr.mxu0 0.0
        %2129 = vmatpush1.msra.mxu0 0.0
        %2130 = vmatprep.subr.mxu0 0.0
        %2131 = vmatpush1.msra.mxu0 0.0
        %2132 = vmatprep.mubr.f32.mxu0 0.0
        %2133 = vmatmul.mubr.f32.gmra.mrb[0].mxu0 %v1891
        %v2134 = vpop.f32.mrb[0].mxu0
        %v2135 = vadd.f32 0.0, %v2134
        %v2136 = vpop.f32.mrb[0].mxu0
        %v2137 = vadd.f32 0.0, %v2136
        %2138 = vmatprep.mubr.f32.mxu0 0.0
        %2139 = vmatmul.mubr.f32.gmra.mrb[0].mxu0 %v1892
        %v2140 = vpop.f32.mrb[0].mxu0
        %v2141 = vadd.f32 0.0, %v2140
        %v2142 = vpop.f32.mrb[0].mxu0
        %v2143 = vadd.f32 0.0, %v2142
        %2144 = vmatprep.mubr.f32.mxu0 0.0
        %2145 = vmatmul.mubr.f32.gmra.mrb[0].mxu0 %v1893
        %v2146 = vpop.f32.mrb[0].mxu0
        %v2147 = vadd.f32 0.0, %v2146
        %v2148 = vpop.f32.mrb[0].mxu0
        %v2149 = vadd.f32 0.0, %v2148
        %2150 = vmatprep.mubr.f32.mxu0 0.0
        %2151 = vmatmul.mubr.f32.gmra.mrb[0].mxu0 %v1894
        %v2152 = vpop.f32.mrb[0].mxu0
        %v2153 = vadd.f32 0.0, %v2152
        %v2154 = vpop.f32.mrb[0].mxu0
        %v2155 = vadd.f32 0.0, %v2154
        %2156 = vmatprep.mubr.f32.mxu0 0.0
        %2157 = vmatmul.mubr.f32.gmra.mrb[0].mxu0 %v1895
        %v2158 = vpop.f32.mrb[0].mxu0
        %v2159 = vadd.f32 0.0, %v2158
        %v2160 = vpop.f32.mrb[0].mxu0
        %v2161 = vadd.f32 0.0, %v2160
        %2162 = vmatprep.mubr.f32.mxu0 0.0
        %2163 = vmatmul.mubr.f32.gmra.mrb[0].mxu0 %v1896
        %v2164 = vpop.f32.mrb[0].mxu0
        %v2165 = vadd.f32 0.0, %v2164
        %v2166 = vpop.f32.mrb[0].mxu0
        %v2167 = vadd.f32 0.0, %v2166
        %2168 = vmatprep.mubr.f32.mxu0 0.0
        %2169 = vmatmul.mubr.f32.gmra.mrb[0].mxu0 %v1897
        %v2170 = vpop.f32.mrb[0].mxu0
        %v2171 = vadd.f32 0.0, %v2170
        %v2172 = vpop.f32.mrb[0].mxu0
        %v2173 = vadd.f32 0.0, %v2172
        %2174 = vmatprep.mubr.f32.mxu0 0.0
        %2175 = vmatmul.mubr.f32.gmra.mrb[0].mxu0 %v1898
        %v2176 = vpop.f32.mrb[0].mxu0
        %v2177 = vadd.f32 0.0, %v2176
        %v2178 = vpop.f32.mrb[0].mxu0
        %v2179 = vadd.f32 0.0, %v2178
        %2180 = vmatprep.mubr.f32.mxu0 0.0
        %2181 = vmatmul.mubr.f32.gmra.mrb[0].mxu0 %v1899
        %v2182 = vpop.f32.mrb[0].mxu0
        %v2183 = vadd.f32 0.0, %v2182
        %v2184 = vpop.f32.mrb[0].mxu0
        %v2185 = vadd.f32 0.0, %v2184
        %2186 = vmatprep.mubr.f32.mxu0 0.0
        %2187 = vmatmul.mubr.f32.gmra.mrb[0].mxu0 %v1900
        %v2188 = vpop.f32.mrb[0].mxu0
        %v2189 = vadd.f32 0.0, %v2188
        %v2190 = vpop.f32.mrb[0].mxu0
        %v2191 = vadd.f32 0.0, %v2190
        %2192 = vmatprep.mubr.f32.mxu0 0.0
        %2193 = vmatmul.mubr.f32.gmra.mrb[0].mxu0 %v1901
        %v2194 = vpop.f32.mrb[0].mxu0
        %v2195 = vadd.f32 0.0, %v2194
        %v2196 = vpop.f32.mrb[0].mxu0
        %v2197 = vadd.f32 0.0, %v2196
        %2198 = vmatprep.mubr.f32.mxu0 0.0
        %2199 = vmatmul.mubr.f32.gmra.mrb[0].mxu0 %v1902
        %v2200 = vpop.f32.mrb[0].mxu0
        %v2201 = vadd.f32 0.0, %v2200
        %v2202 = vpop.f32.mrb[0].mxu0
        %v2203 = vadd.f32 0.0, %v2202
        %2204 = vmatprep.mubr.f32.mxu0 0.0
        %2205 = vmatmul.mubr.f32.gmra.mrb[0].mxu0 %v1903
        %v2206 = vpop.f32.mrb[0].mxu0
        %v2207 = vadd.f32 0.0, %v2206
        %v2208 = vpop.f32.mrb[0].mxu0
        %v2209 = vadd.f32 0.0, %v2208
        %2210 = vmatprep.mubr.f32.mxu0 0.0
        %2211 = vmatmul.mubr.f32.gmra.mrb[0].mxu0 %v1904
        %v2212 = vpop.f32.mrb[0].mxu0
        %v2213 = vadd.f32 0.0, %v2212
        %v2214 = vpop.f32.mrb[0].mxu0
        %v2215 = vadd.f32 0.0, %v2214
        %2216 = vmatprep.mubr.f32.mxu0 0.0
        %2217 = vmatmul.mubr.f32.gmra.mrb[0].mxu0 %v1905
        %v2218 = vpop.f32.mrb[0].mxu0
        %v2219 = vadd.f32 0.0, %v2218
        %v2220 = vpop.f32.mrb[0].mxu0
        %v2221 = vadd.f32 0.0, %v2220
        %2222 = vmatprep.mubr.f32.mxu0 0.0
        %2223 = vmatmul.mubr.f32.gmra.mrb[0].mxu0 %v1906
        %v2224 = vpop.f32.mrb[0].mxu0
        %v2225 = vadd.f32 0.0, %v2224
        %v2226 = vpop.f32.mrb[0].mxu0
        %v2227 = vadd.f32 0.0, %v2226
        %2228 = vdwg.mxu0
        %vm2229 = vcmp.gt.f32.partialorder %v1974, 0.0
        %vm2230 = vcmp.gt.f32.partialorder %v1976, 0.0
        %vm2231 = vcmp.gt.f32.partialorder %v2135, 0.0
        %vm2232 = vcmp.gt.f32.partialorder %v2137, 0.0
        %vm2233 = vcmp.gt.f32.partialorder %v1980, 0.0
        %vm2234 = vcmp.gt.f32.partialorder %v1982, 0.0
        %vm2235 = vcmp.gt.f32.partialorder %v2141, 0.0
        %vm2236 = vcmp.gt.f32.partialorder %v2143, 0.0
        %vm2237 = vcmp.gt.f32.partialorder %v1986, 0.0
        %vm2238 = vcmp.gt.f32.partialorder %v1988, 0.0
        %vm2239 = vcmp.gt.f32.partialorder %v2147, 0.0
        %vm2240 = vcmp.gt.f32.partialorder %v2149, 0.0
        %vm2241 = vcmp.gt.f32.partialorder %v1992, 0.0
        %vm2242 = vcmp.gt.f32.partialorder %v1994, 0.0
        %vm2243 = vcmp.gt.f32.partialorder %v2153, 0.0
        %vm2244 = vcmp.gt.f32.partialorder %v2155, 0.0
        %vm2245 = vcmp.gt.f32.partialorder %v1998, 0.0
        %vm2246 = vcmp.gt.f32.partialorder %v2000, 0.0
        %vm2247 = vcmp.gt.f32.partialorder %v2159, 0.0
        %vm2248 = vcmp.gt.f32.partialorder %v2161, 0.0
        %vm2249 = vcmp.gt.f32.partialorder %v2004, 0.0
        %vm2250 = vcmp.gt.f32.partialorder %v2006, 0.0
        %vm2251 = vcmp.gt.f32.partialorder %v2165, 0.0
        %vm2252 = vcmp.gt.f32.partialorder %v2167, 0.0
        %vm2253 = vcmp.gt.f32.partialorder %v2010, 0.0
        %vm2254 = vcmp.gt.f32.partialorder %v2012, 0.0
        %vm2255 = vcmp.gt.f32.partialorder %v2171, 0.0
        %vm2256 = vcmp.gt.f32.partialorder %v2173, 0.0
        %vm2257 = vcmp.gt.f32.partialorder %v2016, 0.0
        %vm2258 = vcmp.gt.f32.partialorder %v2018, 0.0
        %vm2259 = vcmp.gt.f32.partialorder %v2177, 0.0
        %vm2260 = vcmp.gt.f32.partialorder %v2179, 0.0
        %vm2261 = vcmp.gt.f32.partialorder %v2022, 0.0
        %vm2262 = vcmp.gt.f32.partialorder %v2024, 0.0
        %vm2263 = vcmp.gt.f32.partialorder %v2183, 0.0
        %vm2264 = vcmp.gt.f32.partialorder %v2185, 0.0
        %vm2265 = vcmp.gt.f32.partialorder %v2028, 0.0
        %vm2266 = vcmp.gt.f32.partialorder %v2030, 0.0
        %vm2267 = vcmp.gt.f32.partialorder %v2189, 0.0
        %vm2268 = vcmp.gt.f32.partialorder %v2191, 0.0
        %vm2269 = vcmp.gt.f32.partialorder %v2034, 0.0
        %vm2270 = vcmp.gt.f32.partialorder %v2036, 0.0
        %vm2271 = vcmp.gt.f32.partialorder %v2195, 0.0
        %vm2272 = vcmp.gt.f32.partialorder %v2197, 0.0
        %vm2273 = vcmp.gt.f32.partialorder %v2040, 0.0
        %vm2274 = vcmp.gt.f32.partialorder %v2042, 0.0
        %vm2275 = vcmp.gt.f32.partialorder %v2201, 0.0
        %vm2276 = vcmp.gt.f32.partialorder %v2203, 0.0
        %vm2277 = vcmp.gt.f32.partialorder %v2046, 0.0
        %vm2278 = vcmp.gt.f32.partialorder %v2048, 0.0
        %vm2279 = vcmp.gt.f32.partialorder %v2207, 0.0
        %vm2280 = vcmp.gt.f32.partialorder %v2209, 0.0
        %vm2281 = vcmp.gt.f32.partialorder %v2052, 0.0
        %vm2282 = vcmp.gt.f32.partialorder %v2054, 0.0
        %vm2283 = vcmp.gt.f32.partialorder %v2213, 0.0
        %vm2284 = vcmp.gt.f32.partialorder %v2215, 0.0
        %vm2285 = vcmp.gt.f32.partialorder %v2058, 0.0
        %vm2286 = vcmp.gt.f32.partialorder %v2060, 0.0
        %vm2287 = vcmp.gt.f32.partialorder %v2219, 0.0
        %vm2288 = vcmp.gt.f32.partialorder %v2221, 0.0
        %vm2289 = vcmp.gt.f32.partialorder %v2064, 0.0
        %vm2290 = vcmp.gt.f32.partialorder %v2066, 0.0
        %vm2291 = vcmp.gt.f32.partialorder %v2225, 0.0
        %vm2292 = vcmp.gt.f32.partialorder %v2227, 0.0
        %v2293 = vmul.f32 %v1974, 0.01
        %v2294 = vmul.f32 %v1976, 0.01
        %v2295 = vmul.f32 %v2135, 0.01
        %v2296 = vmul.f32 %v2137, 0.01
        %v2297 = vmul.f32 %v1980, 0.01
        %v2298 = vmul.f32 %v1982, 0.01
        %v2299 = vmul.f32 %v2141, 0.01
        %v2300 = vmul.f32 %v2143, 0.01
        %v2301 = vmul.f32 %v1986, 0.01
        %v2302 = vmul.f32 %v1988, 0.01
        %v2303 = vmul.f32 %v2147, 0.01
        %v2304 = vmul.f32 %v2149, 0.01
        %v2305 = vmul.f32 %v1992, 0.01
        %v2306 = vmul.f32 %v1994, 0.01
        %v2307 = vmul.f32 %v2153, 0.01
        %v2308 = vmul.f32 %v2155, 0.01
        %v2309 = vmul.f32 %v1998, 0.01
        %v2310 = vmul.f32 %v2000, 0.01
        %v2311 = vmul.f32 %v2159, 0.01
        %v2312 = vmul.f32 %v2161, 0.01
        %v2313 = vmul.f32 %v2004, 0.01
        %v2314 = vmul.f32 %v2006, 0.01
        %v2315 = vmul.f32 %v2165, 0.01
        %v2316 = vmul.f32 %v2167, 0.01
        %v2317 = vmul.f32 %v2010, 0.01
        %v2318 = vmul.f32 %v2012, 0.01
        %v2319 = vmul.f32 %v2171, 0.01
        %v2320 = vmul.f32 %v2173, 0.01
        %v2321 = vmul.f32 %v2016, 0.01
        %v2322 = vmul.f32 %v2018, 0.01
        %v2323 = vmul.f32 %v2177, 0.01
        %v2324 = vmul.f32 %v2179, 0.01
        %v2325 = vmul.f32 %v2022, 0.01
        %v2326 = vmul.f32 %v2024, 0.01
        %v2327 = vmul.f32 %v2183, 0.01
        %v2328 = vmul.f32 %v2185, 0.01
        %v2329 = vmul.f32 %v2028, 0.01
        %v2330 = vmul.f32 %v2030, 0.01
        %v2331 = vmul.f32 %v2189, 0.01
        %v2332 = vmul.f32 %v2191, 0.01
        %v2333 = vmul.f32 %v2034, 0.01
        %v2334 = vmul.f32 %v2036, 0.01
        %v2335 = vmul.f32 %v2195, 0.01
        %v2336 = vmul.f32 %v2197, 0.01
        %v2337 = vmul.f32 %v2040, 0.01
        %v2338 = vmul.f32 %v2042, 0.01
        %v2339 = vmul.f32 %v2201, 0.01
        %v2340 = vmul.f32 %v2203, 0.01
        %v2341 = vmul.f32 %v2046, 0.01
        %v2342 = vmul.f32 %v2048, 0.01
        %v2343 = vmul.f32 %v2207, 0.01
        %v2344 = vmul.f32 %v2209, 0.01
        %v2345 = vmul.f32 %v2052, 0.01
        %v2346 = vmul.f32 %v2054, 0.01
        %v2347 = vmul.f32 %v2213, 0.01
        %v2348 = vmul.f32 %v2215, 0.01
        %v2349 = vmul.f32 %v2058, 0.01
        %v2350 = vmul.f32 %v2060, 0.01
        %v2351 = vmul.f32 %v2219, 0.01
        %v2352 = vmul.f32 %v2221, 0.01
        %v2353 = vmul.f32 %v2064, 0.01
        %v2354 = vmul.f32 %v2066, 0.01
        %v2355 = vmul.f32 %v2225, 0.01
        %v2356 = vmul.f32 %v2227, 0.01
        %v2357 = vsel %vm2229, %v1974, %v2293
        %v2358 = vsel %vm2230, %v1976, %v2294
        %v2359 = vsel %vm2231, %v2135, %v2295
        %v2360 = vsel %vm2232, %v2137, %v2296
        %v2361 = vsel %vm2233, %v1980, %v2297
        %v2362 = vsel %vm2234, %v1982, %v2298
        %v2363 = vsel %vm2235, %v2141, %v2299
        %v2364 = vsel %vm2236, %v2143, %v2300
        %v2365 = vsel %vm2237, %v1986, %v2301
        %v2366 = vsel %vm2238, %v1988, %v2302
        %v2367 = vsel %vm2239, %v2147, %v2303
        %v2368 = vsel %vm2240, %v2149, %v2304
        %v2369 = vsel %vm2241, %v1992, %v2305
        %v2370 = vsel %vm2242, %v1994, %v2306
        %v2371 = vsel %vm2243, %v2153, %v2307
        %v2372 = vsel %vm2244, %v2155, %v2308
        %v2373 = vsel %vm2245, %v1998, %v2309
        %v2374 = vsel %vm2246, %v2000, %v2310
        %v2375 = vsel %vm2247, %v2159, %v2311
        %v2376 = vsel %vm2248, %v2161, %v2312
        %v2377 = vsel %vm2249, %v2004, %v2313
        %v2378 = vsel %vm2250, %v2006, %v2314
        %v2379 = vsel %vm2251, %v2165, %v2315
        %v2380 = vsel %vm2252, %v2167, %v2316
        %v2381 = vsel %vm2253, %v2010, %v2317
        %v2382 = vsel %vm2254, %v2012, %v2318
        %v2383 = vsel %vm2255, %v2171, %v2319
        %v2384 = vsel %vm2256, %v2173, %v2320
        %v2385 = vsel %vm2257, %v2016, %v2321
        %v2386 = vsel %vm2258, %v2018, %v2322
        %v2387 = vsel %vm2259, %v2177, %v2323
        %v2388 = vsel %vm2260, %v2179, %v2324
        %v2389 = vsel %vm2261, %v2022, %v2325
        %v2390 = vsel %vm2262, %v2024, %v2326
        %v2391 = vsel %vm2263, %v2183, %v2327
        %v2392 = vsel %vm2264, %v2185, %v2328
        %v2393 = vsel %vm2265, %v2028, %v2329
        %v2394 = vsel %vm2266, %v2030, %v2330
        %v2395 = vsel %vm2267, %v2189, %v2331
        %v2396 = vsel %vm2268, %v2191, %v2332
        %v2397 = vsel %vm2269, %v2034, %v2333
        %v2398 = vsel %vm2270, %v2036, %v2334
        %v2399 = vsel %vm2271, %v2195, %v2335
        %v2400 = vsel %vm2272, %v2197, %v2336
        %v2401 = vsel %vm2273, %v2040, %v2337
        %v2402 = vsel %vm2274, %v2042, %v2338
        %v2403 = vsel %vm2275, %v2201, %v2339
        %v2404 = vsel %vm2276, %v2203, %v2340
        %v2405 = vsel %vm2277, %v2046, %v2341
        %v2406 = vsel %vm2278, %v2048, %v2342
        %v2407 = vsel %vm2279, %v2207, %v2343
        %v2408 = vsel %vm2280, %v2209, %v2344
        %v2409 = vsel %vm2281, %v2052, %v2345
        %v2410 = vsel %vm2282, %v2054, %v2346
        %v2411 = vsel %vm2283, %v2213, %v2347
        %v2412 = vsel %vm2284, %v2215, %v2348
        %v2413 = vsel %vm2285, %v2058, %v2349
        %v2414 = vsel %vm2286, %v2060, %v2350
        %v2415 = vsel %vm2287, %v2219, %v2351
        %v2416 = vsel %vm2288, %v2221, %v2352
        %v2417 = vsel %vm2289, %v2064, %v2353
        %v2418 = vsel %vm2290, %v2066, %v2354
        %v2419 = vsel %vm2291, %v2225, %v2355
        %v2420 = vsel %vm2292, %v2227, %v2356
        %v2421 = vld [vmem:[%s6] sm:$0xff]
        %v2422 = vld [vmem:[%s6 + $0x8] sm:$0xff]
        %v2423 = vld [vmem:[%s6 + $0x10] sm:$0xff]
        %v2424 = vld [vmem:[%s6 + $0x18] sm:$0xff]
        %v2425 = vld [vmem:[%s6 + $0x20] sm:$0xff]
        %v2426 = vld [vmem:[%s6 + $0x28] sm:$0xff]
        %v2427 = vld [vmem:[%s6 + $0x30] sm:$0xff]
        %v2428 = vld [vmem:[%s6 + $0x38] sm:$0xff]
        %v2429 = vld [vmem:[%s6 + $0x40] sm:$0xff]
        %v2430 = vld [vmem:[%s6 + $0x48] sm:$0xff]
        %v2431 = vld [vmem:[%s6 + $0x50] sm:$0xff]
        %v2432 = vld [vmem:[%s6 + $0x58] sm:$0xff]
        %v2433 = vld [vmem:[%s6 + $0x60] sm:$0xff]
        %v2434 = vld [vmem:[%s6 + $0x68] sm:$0xff]
        %v2435 = vld [vmem:[%s6 + $0x70] sm:$0xff]
        %v2436 = vld [vmem:[%s6 + $0x78] sm:$0xff]
        %2438 = vset.pattern.permute.xlu0 0
        %2439 = vperm.xlu0 %2438, %v2421
        %v2440 = vpop.permute.xlu0 %2439
        %2443 = vset.pattern.permute.xlu0 0
        %2444 = vperm.xlu0 %2443, %v2422
        %v2445 = vpop.permute.xlu0 %2444
        %2448 = vset.pattern.permute.xlu0 0
        %2449 = vperm.xlu0 %2448, %v2423
        %v2450 = vpop.permute.xlu0 %2449
        %2453 = vset.pattern.permute.xlu0 0
        %2454 = vperm.xlu0 %2453, %v2424
        %v2455 = vpop.permute.xlu0 %2454
        %2458 = vset.pattern.permute.xlu0 0
        %2459 = vperm.xlu0 %2458, %v2425
        %v2460 = vpop.permute.xlu0 %2459
        %2463 = vset.pattern.permute.xlu0 0
        %2464 = vperm.xlu0 %2463, %v2426
        %v2465 = vpop.permute.xlu0 %2464
        %2468 = vset.pattern.permute.xlu0 0
        %2469 = vperm.xlu0 %2468, %v2427
        %v2470 = vpop.permute.xlu0 %2469
        %2473 = vset.pattern.permute.xlu0 0
        %2474 = vperm.xlu0 %2473, %v2428
        %v2475 = vpop.permute.xlu0 %2474
        %2478 = vset.pattern.permute.xlu0 0
        %2479 = vperm.xlu0 %2478, %v2429
        %v2480 = vpop.permute.xlu0 %2479
        %2483 = vset.pattern.permute.xlu0 0
        %2484 = vperm.xlu0 %2483, %v2430
        %v2485 = vpop.permute.xlu0 %2484
        %2488 = vset.pattern.permute.xlu0 0
        %2489 = vperm.xlu0 %2488, %v2431
        %v2490 = vpop.permute.xlu0 %2489
        %2493 = vset.pattern.permute.xlu0 0
        %2494 = vperm.xlu0 %2493, %v2432
        %v2495 = vpop.permute.xlu0 %2494
        %2498 = vset.pattern.permute.xlu0 0
        %2499 = vperm.xlu0 %2498, %v2433
        %v2500 = vpop.permute.xlu0 %2499
        %2503 = vset.pattern.permute.xlu0 0
        %2504 = vperm.xlu0 %2503, %v2434
        %v2505 = vpop.permute.xlu0 %2504
        %2508 = vset.pattern.permute.xlu0 0
        %2509 = vperm.xlu0 %2508, %v2435
        %v2510 = vpop.permute.xlu0 %2509
        %2513 = vset.pattern.permute.xlu0 0
        %2514 = vperm.xlu0 %2513, %v2436
        %v2515 = vpop.permute.xlu0 %2514
        %v2517 = vmul.f32 %v2440, %v2357
        %v2518 = vmul.f32 %v2440, %v2358
        %v2519 = vmul.f32 %v2440, %v2359
        %v2520 = vmul.f32 %v2440, %v2360
        %v2521 = vmul.f32 %v2445, %v2361
        %v2522 = vmul.f32 %v2445, %v2362
        %v2523 = vmul.f32 %v2445, %v2363
        %v2524 = vmul.f32 %v2445, %v2364
        %v2525 = vmul.f32 %v2450, %v2365
        %v2526 = vmul.f32 %v2450, %v2366
        %v2527 = vmul.f32 %v2450, %v2367
        %v2528 = vmul.f32 %v2450, %v2368
        %v2529 = vmul.f32 %v2455, %v2369
        %v2530 = vmul.f32 %v2455, %v2370
        %v2531 = vmul.f32 %v2455, %v2371
        %v2532 = vmul.f32 %v2455, %v2372
        %v2533 = vmul.f32 %v2460, %v2373
        %v2534 = vmul.f32 %v2460, %v2374
        %v2535 = vmul.f32 %v2460, %v2375
        %v2536 = vmul.f32 %v2460, %v2376
        %v2537 = vmul.f32 %v2465, %v2377
        %v2538 = vmul.f32 %v2465, %v2378
        %v2539 = vmul.f32 %v2465, %v2379
        %v2540 = vmul.f32 %v2465, %v2380
        %v2541 = vmul.f32 %v2470, %v2381
        %v2542 = vmul.f32 %v2470, %v2382
        %v2543 = vmul.f32 %v2470, %v2383
        %v2544 = vmul.f32 %v2470, %v2384
        %v2545 = vmul.f32 %v2475, %v2385
        %v2546 = vmul.f32 %v2475, %v2386
        %v2547 = vmul.f32 %v2475, %v2387
        %v2548 = vmul.f32 %v2475, %v2388
        %v2549 = vmul.f32 %v2480, %v2389
        %v2550 = vmul.f32 %v2480, %v2390
        %v2551 = vmul.f32 %v2480, %v2391
        %v2552 = vmul.f32 %v2480, %v2392
        %v2553 = vmul.f32 %v2485, %v2393
        %v2554 = vmul.f32 %v2485, %v2394
        %v2555 = vmul.f32 %v2485, %v2395
        %v2556 = vmul.f32 %v2485, %v2396
        %v2557 = vmul.f32 %v2490, %v2397
        %v2558 = vmul.f32 %v2490, %v2398
        %v2559 = vmul.f32 %v2490, %v2399
        %v2560 = vmul.f32 %v2490, %v2400
        %v2561 = vmul.f32 %v2495, %v2401
        %v2562 = vmul.f32 %v2495, %v2402
        %v2563 = vmul.f32 %v2495, %v2403
        %v2564 = vmul.f32 %v2495, %v2404
        %v2565 = vmul.f32 %v2500, %v2405
        %v2566 = vmul.f32 %v2500, %v2406
        %v2567 = vmul.f32 %v2500, %v2407
        %v2568 = vmul.f32 %v2500, %v2408
        %v2569 = vmul.f32 %v2505, %v2409
        %v2570 = vmul.f32 %v2505, %v2410
        %v2571 = vmul.f32 %v2505, %v2411
        %v2572 = vmul.f32 %v2505, %v2412
        %v2573 = vmul.f32 %v2510, %v2413
        %v2574 = vmul.f32 %v2510, %v2414
        %v2575 = vmul.f32 %v2510, %v2415
        %v2576 = vmul.f32 %v2510, %v2416
        %v2577 = vmul.f32 %v2515, %v2417
        %v2578 = vmul.f32 %v2515, %v2418
        %v2579 = vmul.f32 %v2515, %v2419
        %v2580 = vmul.f32 %v2515, %v2420
        %v2581 = vadd.f32 %v2517, %v2521
        %v2582 = vadd.f32 %v2581, %v2525
        %v2583 = vadd.f32 %v2582, %v2529
        %v2584 = vadd.f32 %v2583, %v2533
        %v2585 = vadd.f32 %v2584, %v2537
        %v2586 = vadd.f32 %v2585, %v2541
        %v2587 = vadd.f32 %v2586, %v2545
        %v2588 = vadd.f32 %v2587, %v2549
        %v2589 = vadd.f32 %v2588, %v2553
        %v2590 = vadd.f32 %v2589, %v2557
        %v2591 = vadd.f32 %v2590, %v2561
        %v2592 = vadd.f32 %v2591, %v2565
        %v2593 = vadd.f32 %v2592, %v2569
        %v2594 = vadd.f32 %v2593, %v2573
        %v2595 = vadd.f32 %v2594, %v2577
        %v2596 = vrot.slane %v2595, 4
        %v2597 = vadd.f32 %v2595, %v2596
        %v2598 = vrot.slane %v2597, 2
        %v2599 = vadd.f32 %v2597, %v2598
        %v2600 = vrot.slane %v2599, 1
        %v2601 = vadd.f32 %v2599, %v2600
        %v2602 = vadd.f32 %v2518, %v2522
        %v2603 = vadd.f32 %v2602, %v2526
        %v2604 = vadd.f32 %v2603, %v2530
        %v2605 = vadd.f32 %v2604, %v2534
        %v2606 = vadd.f32 %v2605, %v2538
        %v2607 = vadd.f32 %v2606, %v2542
        %v2608 = vadd.f32 %v2607, %v2546
        %v2609 = vadd.f32 %v2608, %v2550
        %v2610 = vadd.f32 %v2609, %v2554
        %v2611 = vadd.f32 %v2610, %v2558
        %v2612 = vadd.f32 %v2611, %v2562
        %v2613 = vadd.f32 %v2612, %v2566
        %v2614 = vadd.f32 %v2613, %v2570
        %v2615 = vadd.f32 %v2614, %v2574
        %v2616 = vadd.f32 %v2615, %v2578
        %v2617 = vrot.slane %v2616, 4
        %v2618 = vadd.f32 %v2616, %v2617
        %v2619 = vrot.slane %v2618, 2
        %v2620 = vadd.f32 %v2618, %v2619
        %v2621 = vrot.slane %v2620, 1
        %v2622 = vadd.f32 %v2620, %v2621
        %v2623 = vadd.f32 %v2519, %v2523
        %v2624 = vadd.f32 %v2623, %v2527
        %v2625 = vadd.f32 %v2624, %v2531
        %v2626 = vadd.f32 %v2625, %v2535
        %v2627 = vadd.f32 %v2626, %v2539
        %v2628 = vadd.f32 %v2627, %v2543
        %v2629 = vadd.f32 %v2628, %v2547
        %v2630 = vadd.f32 %v2629, %v2551
        %v2631 = vadd.f32 %v2630, %v2555
        %v2632 = vadd.f32 %v2631, %v2559
        %v2633 = vadd.f32 %v2632, %v2563
        %v2634 = vadd.f32 %v2633, %v2567
        %v2635 = vadd.f32 %v2634, %v2571
        %v2636 = vadd.f32 %v2635, %v2575
        %v2637 = vadd.f32 %v2636, %v2579
        %v2638 = vrot.slane %v2637, 4
        %v2639 = vadd.f32 %v2637, %v2638
        %v2640 = vrot.slane %v2639, 2
        %v2641 = vadd.f32 %v2639, %v2640
        %v2642 = vrot.slane %v2641, 1
        %v2643 = vadd.f32 %v2641, %v2642
        %v2644 = vadd.f32 %v2520, %v2524
        %v2645 = vadd.f32 %v2644, %v2528
        %v2646 = vadd.f32 %v2645, %v2532
        %v2647 = vadd.f32 %v2646, %v2536
        %v2648 = vadd.f32 %v2647, %v2540
        %v2649 = vadd.f32 %v2648, %v2544
        %v2650 = vadd.f32 %v2649, %v2548
        %v2651 = vadd.f32 %v2650, %v2552
        %v2652 = vadd.f32 %v2651, %v2556
        %v2653 = vadd.f32 %v2652, %v2560
        %v2654 = vadd.f32 %v2653, %v2564
        %v2655 = vadd.f32 %v2654, %v2568
        %v2656 = vadd.f32 %v2655, %v2572
        %v2657 = vadd.f32 %v2656, %v2576
        %v2658 = vadd.f32 %v2657, %v2580
        %v2659 = vrot.slane %v2658, 4
        %v2660 = vadd.f32 %v2658, %v2659
        %v2661 = vrot.slane %v2660, 2
        %v2662 = vadd.f32 %v2660, %v2661
        %v2663 = vrot.slane %v2662, 1
        %v2664 = vadd.f32 %v2662, %v2663
        %v2669 = vcombine.low %v2601, %v2622
        %v2670 = vcombine.low %v2643, %v2664
        %v2672 = vunpack.c.l.s4 1966171168
        %v2673 = vunpack.c.0.s8 %v2672
        %v2674 = vlaneseq
        %v2675 = vshrl.u32 %v2674, 7
        %v2676 = vsub.s32 %v2673, %v2675
        %v2677 = vrot.slane %v2669, %v2676
        %v2679 = vunpack.c.l.s4 1966171168
        %v2680 = vunpack.c.0.s8 %v2679
        %v2681 = vlaneseq
        %v2682 = vshrl.u32 %v2681, 7
        %v2683 = vsub.s32 %v2680, %v2682
        %v2684 = vrot.slane %v2670, %v2683
        %v2685 = vcombine.low %v2677, %v2684
        %v2687 = vunpack.c.l.s4 1966171168
        %v2688 = vunpack.c.0.s8 %v2687
        %v2689 = vlaneseq
        %v2690 = vshrl.u32 %v2689, 7
        %v2691 = vsub.s32 %v2688, %v2690
        %v2692 = vrot.slane %v2685, %v2691
        %v2694 = vlaneseq
        %vm2695 = vcmp.ge.s32.totalorder %v2694, 0
        %vm2696 = vcmp.lt.s32.totalorder %v2694, 512
        %vm2697 = vmand %vm2695, %vm2696
        %2698 = vst.msk [vmem:[%s294] sm:$0xf] %vm2697, %v2692
        %s2699 = sand.u32 %s184, 1
        %s2700 = scalar_lea.sflag [#allocation4], %s2699
        %s2701 = sand.u32 %s184, 1
        %s2702 = smul.addr %s2701, 4
        %s2703 = scalar_lea.vmem [#allocation5], %s2702
        // Predicated region
        $region53: #{fit_forward.1} parent=47 // pred_check
          %p2704 = pneg %p194
        $region54: #{fit_forward.1} parent=47 // pred_check_branch
          %2706 = sbr.rel (%p2704) target = $region56
        $region55: #{fit_forward.1} parent=47 // pred_region
          %s2707 = smul.u32 4, %s24
          %s2709 = ssub.s32 64, 64
          %2710 = vsyncadd %s2700, %s2709
          %s2711 = smul.addr %s2707, 16
          %s2712 = scalar_lea.hbm %s7, %s2711
          %s2714 = sshll.u32 %s2703, 4
          %s2715 = int_to_ptr.vmem [resolvable:$true] %s2714
          %2717 = dma.vmem_to_hbm [thread:$0]  %s2715, 64, %s2712, %s2700
        $region56: #{fit_forward.1} parent=47 // pred_fallthru
          _
      $region48: #{fit_forward.1} parent=5 // pred_fallthru
        _
      %p2718 = scmp.le.s32.totalorder 2, %s19
      // Predicated region
      $region57: #{fit_forward.1} parent=5 // pred_check
        %p2719 = pneg %p2718
      $region58: #{fit_forward.1} parent=5 // pred_check_branch
        %2721 = sbr.rel (%p2719) target = $region60
      $region59: #{fit_forward.1} parent=5 // pred_region
        %s2722 = ssub.s32 %s19, 2
        // Predicated region
        $region61: #{fit_forward.1} parent=59 // pred_check
          %p2723 = pneg %p200
        $region62: #{fit_forward.1} parent=59 // pred_check_branch
          %2725 = sbr.rel (%p2723) target = $region64
        $region63: #{fit_forward.1} parent=59 // pred_region
          %s2726 = sand.u32 %s185, 1
          %s2727 = scalar_lea.sflag [#allocation4], %s2726
          %s2728 = sand.u32 %s185, 1
          %s2729 = smul.addr %s2728, 4
          %s2730 = scalar_lea.vmem [#allocation5], %s2729
          %2731 = dma.done %s2727, 64
        $region64: #{fit_forward.1} parent=59 // pred_fallthru
          _
      $region60: #{fit_forward.1} parent=5 // pred_fallthru
        _
    $region6: #{fit_forward.1} parent=1 // loop_footer
      %s23 = sadd.s32 1, %s19
    $region7: #{fit_forward.1} parent=1 // loop_footer_branch
      %18 = sbr.rel target = $region3
    $region8: #{fit_forward.1} parent=1 // loop_exit
      _
    %2732 = vsyncpa [#allocation3], 1
    %s2733 = scalar_lea.sflag [#allocation3], 1
    %2734 = vsyncpa %s2733, 1
    %2735 = vsyncpa [#allocation4], 1
    %s2736 = scalar_lea.sflag [#allocation4], 1
    %2737 = vsyncpa %s2736, 1

</llo_original>
